<compile_context>
chip_gen: v6e
topology: v6e:2x2x1
jax: 0.10.0
libtpu: 0.0.40
codegen_flags: <defaults>
</compile_context>

<pallas_src>
import functools

import jax
import jax.numpy as jnp
from jax.experimental import pallas as pl
from jax.experimental.pallas import tpu as pltpu

LANE = 128
EPS = 1e-5  # PyTorch BatchNorm2d default


def _round_up(v, m):
    return (v + m - 1) // m * m


# ----------------------------- kernels --------------------------------------


def _conv_bn_kernel(taps_ref, w_ref, scale_ref, bias_ref, o_ref, *, relu):
    # taps: (TM, 9*CP) im2col rows; w: (9*CP, CP); scale/bias: (1, CP) folded BN
    y = jnp.dot(taps_ref[...], w_ref[...], preferred_element_type=jnp.float32)
    y = y * scale_ref[...] + bias_ref[...]
    if relu:
        y = jnp.maximum(y, 0.0)
    o_ref[...] = y.astype(o_ref.dtype)


def _conv_bn_add_relu_kernel(taps_ref, w_ref, scale_ref, bias_ref, short_ref, o_ref):
    # conv2 + bn2 + identity residual + relu (shortcut kept in f32 for exact add)
    y = jnp.dot(taps_ref[...], w_ref[...], preferred_element_type=jnp.float32)
    y = y * scale_ref[...] + bias_ref[...]
    y = y + short_ref[...].astype(jnp.float32)
    o_ref[...] = jnp.maximum(y, 0.0).astype(o_ref.dtype)


def _conv_bn_proj_add_relu_kernel(taps_ref, w_ref, scale_ref, bias_ref,
                                  sin_ref, ws_ref, scale_s_ref, bias_s_ref, o_ref):
    # conv2 + bn2 + (1x1 conv + bn) projection residual + relu
    y = jnp.dot(taps_ref[...], w_ref[...], preferred_element_type=jnp.float32)
    y = y * scale_ref[...] + bias_ref[...]
    s = jnp.dot(sin_ref[...], ws_ref[...], preferred_element_type=jnp.float32)
    s = s * scale_s_ref[...] + bias_s_ref[...]
    o_ref[...] = jnp.maximum(y + s, 0.0).astype(o_ref.dtype)


# --------------------------- wrapper helpers ---------------------------------


def _fold_bn(gamma, beta, mean, var, cp):
    scale = gamma / jnp.sqrt(var + EPS)
    bias = beta - mean * scale
    c = gamma.shape[0]
    scale = jnp.pad(scale, (0, cp - c)).reshape(1, cp).astype(jnp.float32)
    bias = jnp.pad(bias, (0, cp - c)).reshape(1, cp).astype(jnp.float32)
    return scale, bias


def _im2col_3x3(x_nhwc, stride):
    """(B, H, W, CP) -> (B*Ho*Wo, 9*CP) patches of a 3x3 / pad-1 / stride-s conv."""
    B, H, W, CP = x_nhwc.shape
    Ho = (H + 2 - 3) // stride + 1
    Wo = (W + 2 - 3) // stride + 1
    xp = jnp.pad(x_nhwc, ((0, 0), (1, 1), (1, 1), (0, 0)))
    taps = []
    for ky in range(3):
        for kx in range(3):
            taps.append(xp[:, ky:ky + (Ho - 1) * stride + 1:stride,
                           kx:kx + (Wo - 1) * stride + 1:stride, :])
    t = jnp.stack(taps, axis=3)                       # (B, Ho, Wo, 9, CP)
    return t.reshape(B * Ho * Wo, 9 * CP), Ho, Wo


def _pad_rows(a, m_pad):
    return jnp.pad(a, ((0, m_pad - a.shape[0]), (0, 0)))


_CPARAMS = pltpu.CompilerParams(
    dimension_semantics=("parallel",),
    vmem_limit_bytes=48 << 20,
)


def _stage1(taps, w, scale, bias, *, tm, compute_dtype):
    m_pad, kdim = taps.shape
    cp = w.shape[1]
    return pl.pallas_call(
        functools.partial(_conv_bn_kernel, relu=True),
        out_shape=jax.ShapeDtypeStruct((m_pad, cp), jnp.float32),
        grid_spec=pltpu.PrefetchScalarGridSpec(
            num_scalar_prefetch=0,
            grid=(m_pad // tm,),
            in_specs=[
                pl.BlockSpec((tm, kdim), lambda i: (i, 0)),
                pl.BlockSpec((kdim, cp), lambda i: (0, 0)),
                pl.BlockSpec((1, cp), lambda i: (0, 0)),
                pl.BlockSpec((1, cp), lambda i: (0, 0)),
            ],
            out_specs=pl.BlockSpec((tm, cp), lambda i: (i, 0)),
        ),
        compiler_params=_CPARAMS,
    )(taps.astype(compute_dtype), w.astype(compute_dtype), scale, bias)


def _stage2(taps, w, scale, bias, short_in, proj, *, tm, compute_dtype):
    m_pad, kdim = taps.shape
    cp = w.shape[1]
    grid = (m_pad // tm,)
    if proj is None:
        return pl.pallas_call(
            _conv_bn_add_relu_kernel,
            out_shape=jax.ShapeDtypeStruct((m_pad, cp), jnp.float32),
            grid_spec=pltpu.PrefetchScalarGridSpec(
                num_scalar_prefetch=0,
                grid=grid,
                in_specs=[
                    pl.BlockSpec((tm, kdim), lambda i: (i, 0)),
                    pl.BlockSpec((kdim, cp), lambda i: (0, 0)),
                    pl.BlockSpec((1, cp), lambda i: (0, 0)),
                    pl.BlockSpec((1, cp), lambda i: (0, 0)),
                    pl.BlockSpec((tm, cp), lambda i: (i, 0)),
                ],
                out_specs=pl.BlockSpec((tm, cp), lambda i: (i, 0)),
            ),
            compiler_params=_CPARAMS,
        )(taps.astype(compute_dtype), w.astype(compute_dtype), scale, bias,
          short_in)  # identity residual stays f32
    ws, ss, bs = proj
    return pl.pallas_call(
        _conv_bn_proj_add_relu_kernel,
        out_shape=jax.ShapeDtypeStruct((m_pad, cp), jnp.float32),
        grid_spec=pltpu.PrefetchScalarGridSpec(
            num_scalar_prefetch=0,
            grid=grid,
            in_specs=[
                pl.BlockSpec((tm, kdim), lambda i: (i, 0)),
                pl.BlockSpec((kdim, cp), lambda i: (0, 0)),
                pl.BlockSpec((1, cp), lambda i: (0, 0)),
                pl.BlockSpec((1, cp), lambda i: (0, 0)),
                pl.BlockSpec((tm, cp), lambda i: (i, 0)),
                pl.BlockSpec((cp, cp), lambda i: (0, 0)),
                pl.BlockSpec((1, cp), lambda i: (0, 0)),
                pl.BlockSpec((1, cp), lambda i: (0, 0)),
            ],
            out_specs=pl.BlockSpec((tm, cp), lambda i: (i, 0)),
        ),
        compiler_params=_CPARAMS,
    )(taps.astype(compute_dtype), w.astype(compute_dtype), scale, bias,
      short_in.astype(compute_dtype), ws.astype(compute_dtype), ss, bs)


# ------------------------------ forward --------------------------------------


def resnet_block_forward(x_nchw, params, stride=1, compute_dtype=jnp.float32):
    """ResNetBlock forward. x: (B, Cin, H, W) NCHW, PyTorch-layout weights."""
    B, Cin, H, W = x_nchw.shape
    Cout = params["conv1_w"].shape[0]
    CP = _round_up(max(Cin, Cout), LANE)          # lane-dense channel dim

    x = jnp.transpose(x_nchw, (0, 2, 3, 1)).astype(jnp.float32)   # NHWC
    x = jnp.pad(x, ((0, 0), (0, 0), (0, 0), (0, CP - Cin)))

    # ---- stage 1: conv1 (3x3, stride) + bn1 + relu ----
    taps1, Ho, Wo = _im2col_3x3(x, stride)
    M = B * Ho * Wo
    TM = 128 if M >= 128 else _round_up(M, 8)
    M_pad = _round_up(M, TM)
    taps1 = _pad_rows(taps1, M_pad)

    w1 = jnp.transpose(params["conv1_w"], (2, 3, 1, 0)).astype(jnp.float32)
    w1 = jnp.pad(w1, ((0, 0), (0, 0), (0, CP - Cin), (0, CP - Cout))).reshape(9 * CP, CP)
    s1, b1 = _fold_bn(*params["bn1"], CP)
    h1 = _stage1(taps1, w1, s1, b1, tm=TM, compute_dtype=compute_dtype)

    # ---- stage 2: conv2 (3x3, stride 1) + bn2 + shortcut + relu ----
    h1 = h1[:M].reshape(B, Ho, Wo, CP)
    taps2, _, _ = _im2col_3x3(h1, 1)
    taps2 = _pad_rows(taps2, M_pad)
    w2 = jnp.transpose(params["conv2_w"], (2, 3, 1, 0)).astype(jnp.float32)
    w2 = jnp.pad(w2, ((0, 0), (0, 0), (0, CP - Cout), (0, CP - Cout))).reshape(9 * CP, CP)
    s2, b2 = _fold_bn(*params["bn2"], CP)

    if stride != 1 or Cin != Cout:
        # projection shortcut: 1x1 conv (stride s) + BN, fused into stage 2
        short_in = x[:, ::stride, ::stride, :][:, :Ho, :Wo, :].reshape(M, CP)
        short_in = _pad_rows(short_in, M_pad)
        ws = params["conv_s_w"][:, :, 0, 0].T.astype(jnp.float32)   # (Cin, Cout)
        ws = jnp.pad(ws, ((0, CP - Cin), (0, CP - Cout)))
        ss, bs = _fold_bn(*params["bn_s"], CP)
        out = _stage2(taps2, w2, s2, b2, short_in, (ws, ss, bs),
                      tm=TM, compute_dtype=compute_dtype)
    else:
        short_in = _pad_rows(x.reshape(M, CP), M_pad)               # identity
        out = _stage2(taps2, w2, s2, b2, short_in, None,
                      tm=TM, compute_dtype=compute_dtype)

    out = out[:M, :Cout].reshape(B, Ho, Wo, Cout)
    return jnp.transpose(out, (0, 3, 1, 2))                         # back to NCHW


# --------------------------- reference & init --------------------------------


def resnet_block_reference(x, params, stride):
    hi = jax.lax.Precision.HIGHEST

    def conv(x, w, s, pad):
        return jax.lax.conv_general_dilated(
            x, w, window_strides=(s, s), padding=pad,
            dimension_numbers=("NCHW", "OIHW", "NCHW"), precision=hi)

    def bn(y, stats):
        g, b, m, v = stats
        scale = g / jnp.sqrt(v + EPS)
        shift = b - m * scale
        return y * scale[None, :, None, None] + shift[None, :, None, None]

    out = jax.nn.relu(bn(conv(x, params["conv1_w"], stride, [(1, 1), (1, 1)]), params["bn1"]))
    out = bn(conv(out, params["conv2_w"], 1, [(1, 1), (1, 1)]), params["bn2"])
    if "conv_s_w" in params:
        sc = bn(conv(x, params["conv_s_w"], stride, [(0, 0), (0, 0)]), params["bn_s"])
    else:
        sc = x
    return jax.nn.relu(out + sc)


def _init_bn(key, c):
    k1, k2, k3, k4 = jax.random.split(key, 4)
    gamma = jax.random.uniform(k1, (c,), jnp.float32, 0.5, 1.5)
    beta = 0.1 * jax.random.normal(k2, (c,), jnp.float32)
    mean = 0.1 * jax.random.normal(k3, (c,), jnp.float32)
    var = jax.random.uniform(k4, (c,), jnp.float32, 0.5, 1.5)
    return (gamma, beta, mean, var)


def init_params(key, cin, cout, stride):
    k1, k2, k3, k4, k5, k6 = jax.random.split(key, 6)
    p = {
        "conv1_w": jax.random.normal(k1, (cout, cin, 3, 3), jnp.float32) / jnp.sqrt(cin * 9.0),
        "bn1": _init_bn(k2, cout),
        "conv2_w": jax.random.normal(k3, (cout, cout, 3, 3), jnp.float32) / jnp.sqrt(cout * 9.0),
        "bn2": _init_bn(k4, cout),
    }
    if stride != 1 or cin != cout:
        p["conv_s_w"] = jax.random.normal(k5, (cout, cin, 1, 1), jnp.float32) / jnp.sqrt(float(cin))
        p["bn_s"] = _init_bn(k6, cout)
    return p


if __name__ == "__main__":
    key = jax.random.PRNGKey(0)
    kx, kp, kx2, kp2 = jax.random.split(key, 4)

    fwd = jax.jit(resnet_block_forward, static_argnums=(2, 3))

    # Config A: projection shortcut (stride=2, 4 -> 8 channels), x = (2, 4, 16, 16)
    B, Cin, Cout, H, W, stride = 2, 4, 8, 16, 16, 2
    x = jax.random.normal(kx, (B, Cin, H, W), jnp.float32)
    params = init_params(kp, Cin, Cout, stride)

    out_f32 = jax.block_until_ready(fwd(x, params, stride, jnp.float32))
    ref = resnet_block_reference(x, params, stride)
    assert out_f32.shape == (B, Cout, H // stride, W // stride)
    assert bool(jnp.allclose(out_f32, ref, rtol=1e-4, atol=1e-4)), \
        float(jnp.max(jnp.abs(out_f32 - ref)))

    # Same block with bf16 MXU inputs / f32 accumulation (perf feedback) — loose check.
    out_bf16 = jax.block_until_ready(fwd(x, params, stride, jnp.bfloat16))
    assert float(jnp.max(jnp.abs(out_bf16 - ref))) < 0.25

    # Config B: identity shortcut (stride=1, cin == cout == 8)
    x2 = jax.random.normal(kx2, (2, 8, 16, 16), jnp.float32)
    params2 = init_params(kp2, 8, 8, 1)
    out2 = jax.block_until_ready(fwd(x2, params2, 1, jnp.float32))
    ref2 = resnet_block_reference(x2, params2, 1)
    assert out2.shape == (2, 8, 16, 16)
    assert bool(jnp.allclose(out2, ref2, rtol=1e-4, atol=1e-4)), \
        float(jnp.max(jnp.abs(out2 - ref2)))

    print("KERNEL_OK")
</pallas_src>

<mosaic_0001>
module attributes {stable_mosaic.version = 11 : i64} {
  func.func @_conv_bn_kernel(%arg0: i32, %arg1: memref<128x1152xf32, #tpu.memory_space<vmem>>, %arg2: memref<1152x128xf32, #tpu.memory_space<vmem>>, %arg3: memref<1x128xf32, #tpu.memory_space<vmem>>, %arg4: memref<1x128xf32, #tpu.memory_space<vmem>>, %arg5: memref<128x128xf32, #tpu.memory_space<vmem>>) attributes {dimension_semantics = [#tpu.dimension_semantics<parallel>], iteration_bounds = array<i64: 1>, scalar_prefetch = 0 : i64, scratch_operands = 0 : i64, tpu.core_type = #tpu.core_type<tc>, window_params = [{transform_indices = @transform_0, window_bounds = array<i64: 128, 1152>}, {pipeline_mode = #tpu.pipeline_mode<synchronous>, transform_indices = @transform_1, window_bounds = array<i64: 1152, 128>}, {pipeline_mode = #tpu.pipeline_mode<synchronous>, transform_indices = @transform_2, window_bounds = array<i64: 1, 128>}, {pipeline_mode = #tpu.pipeline_mode<synchronous>, transform_indices = @transform_3, window_bounds = array<i64: 1, 128>}, {transform_indices = @transform_4, window_bounds = array<i64: 128, 128>}]} {
    %c0 = arith.constant 0 : index
    %c0_0 = arith.constant 0 : index
    %0 = vector.load %arg1[%c0, %c0_0] : memref<128x1152xf32, #tpu.memory_space<vmem>>, vector<128x1152xf32>
    %c0_1 = arith.constant 0 : index
    %c0_2 = arith.constant 0 : index
    %1 = vector.load %arg2[%c0_1, %c0_2] : memref<1152x128xf32, #tpu.memory_space<vmem>>, vector<1152x128xf32>
    %cst = arith.constant dense<0.000000e+00> : vector<128x128xf32>
    %2 = tpu.matmul %0, %1, %cst {dimension_numbers = #tpu.dot_dimension_numbers<[1], [0], [0], [1], [0, 0, 1, 1], [], []>} : vector<128x1152xf32>, vector<1152x128xf32>, vector<128x128xf32> -> vector<128x128xf32>
    %c0_3 = arith.constant 0 : index
    %c0_4 = arith.constant 0 : index
    %3 = vector.load %arg3[%c0_3, %c0_4] : memref<1x128xf32, #tpu.memory_space<vmem>>, vector<1x128xf32>
    %4 = vector.broadcast %3 : vector<1x128xf32> to vector<128x128xf32>
    %5 = arith.mulf %2, %4 : vector<128x128xf32>
    %c0_5 = arith.constant 0 : index
    %c0_6 = arith.constant 0 : index
    %6 = vector.load %arg4[%c0_5, %c0_6] : memref<1x128xf32, #tpu.memory_space<vmem>>, vector<1x128xf32>
    %7 = vector.broadcast %6 : vector<1x128xf32> to vector<128x128xf32>
    %8 = arith.addf %5, %7 : vector<128x128xf32>
    %cst_7 = arith.constant 0.000000e+00 : f32
    %9 = vector.broadcast %cst_7 : f32 to vector<128x128xf32>
    %10 = arith.maximumf %8, %9 : vector<128x128xf32>
    %c0_8 = arith.constant 0 : index
    %c0_9 = arith.constant 0 : index
    %11 = vector.load %arg5[%c0_8, %c0_9] : memref<128x128xf32, #tpu.memory_space<vmem>>, vector<128x128xf32>
    tpu.vector_store %arg5[%c0_8, %c0_9], %10 {strides = array<i32>} : memref<128x128xf32, #tpu.memory_space<vmem>>, vector<128x128xf32>,
    return
  }
  func.func @transform_0(%arg0: i32) -> (i32, i32) {
    %c0_i32 = arith.constant 0 : i32
    %c0_i32_0 = arith.constant 0 : i32
    return %arg0, %c0_i32 : i32, i32
  }
  func.func @transform_1(%arg0: i32) -> (i32, i32) {
    %c0_i32 = arith.constant 0 : i32
    %c0_i32_0 = arith.constant 0 : i32
    %c0_i32_1 = arith.constant 0 : i32
    return %c0_i32, %c0_i32_0 : i32, i32
  }
  func.func @transform_2(%arg0: i32) -> (i32, i32) {
    %c0_i32 = arith.constant 0 : i32
    %c0_i32_0 = arith.constant 0 : i32
    %c0_i32_1 = arith.constant 0 : i32
    return %c0_i32, %c0_i32_0 : i32, i32
  }
  func.func @transform_3(%arg0: i32) -> (i32, i32) {
    %c0_i32 = arith.constant 0 : i32
    %c0_i32_0 = arith.constant 0 : i32
    %c0_i32_1 = arith.constant 0 : i32
    return %c0_i32, %c0_i32_0 : i32, i32
  }
  func.func @transform_4(%arg0: i32) -> (i32, i32) {
    %c0_i32 = arith.constant 0 : i32
    %c0_i32_0 = arith.constant 0 : i32
    return %arg0, %c0_i32 : i32, i32
  }
}

module attributes {stable_mosaic.version = 11 : i64} {
  func.func @_conv_bn_proj_add_relu_kernel(%arg0: i32, %arg1: memref<128x1152xf32, #tpu.memory_space<vmem>>, %arg2: memref<1152x128xf32, #tpu.memory_space<vmem>>, %arg3: memref<1x128xf32, #tpu.memory_space<vmem>>, %arg4: memref<1x128xf32, #tpu.memory_space<vmem>>, %arg5: memref<128x128xf32, #tpu.memory_space<vmem>>, %arg6: memref<128x128xf32, #tpu.memory_space<vmem>>, %arg7: memref<1x128xf32, #tpu.memory_space<vmem>>, %arg8: memref<1x128xf32, #tpu.memory_space<vmem>>, %arg9: memref<128x128xf32, #tpu.memory_space<vmem>>) attributes {dimension_semantics = [#tpu.dimension_semantics<parallel>], iteration_bounds = array<i64: 1>, scalar_prefetch = 0 : i64, scratch_operands = 0 : i64, tpu.core_type = #tpu.core_type<tc>, window_params = [{transform_indices = @transform_0, window_bounds = array<i64: 128, 1152>}, {pipeline_mode = #tpu.pipeline_mode<synchronous>, transform_indices = @transform_1, window_bounds = array<i64: 1152, 128>}, {pipeline_mode = #tpu.pipeline_mode<synchronous>, transform_indices = @transform_2, window_bounds = array<i64: 1, 128>}, {pipeline_mode = #tpu.pipeline_mode<synchronous>, transform_indices = @transform_3, window_bounds = array<i64: 1, 128>}, {transform_indices = @transform_4, window_bounds = array<i64: 128, 128>}, {pipeline_mode = #tpu.pipeline_mode<synchronous>, transform_indices = @transform_5, window_bounds = array<i64: 128, 128>}, {pipeline_mode = #tpu.pipeline_mode<synchronous>, transform_indices = @transform_6, window_bounds = array<i64: 1, 128>}, {pipeline_mode = #tpu.pipeline_mode<synchronous>, transform_indices = @transform_7, window_bounds = array<i64: 1, 128>}, {transform_indices = @transform_8, window_bounds = array<i64: 128, 128>}]} {
    %c0 = arith.constant 0 : index
    %c0_0 = arith.constant 0 : index
    %0 = vector.load %arg1[%c0, %c0_0] : memref<128x1152xf32, #tpu.memory_space<vmem>>, vector<128x1152xf32>
    %c0_1 = arith.constant 0 : index
    %c0_2 = arith.constant 0 : index
    %1 = vector.load %arg2[%c0_1, %c0_2] : memref<1152x128xf32, #tpu.memory_space<vmem>>, vector<1152x128xf32>
    %cst = arith.constant dense<0.000000e+00> : vector<128x128xf32>
    %2 = tpu.matmul %0, %1, %cst {dimension_numbers = #tpu.dot_dimension_numbers<[1], [0], [0], [1], [0, 0, 1, 1], [], []>} : vector<128x1152xf32>, vector<1152x128xf32>, vector<128x128xf32> -> vector<128x128xf32>
    %c0_3 = arith.constant 0 : index
    %c0_4 = arith.constant 0 : index
    %3 = vector.load %arg3[%c0_3, %c0_4] : memref<1x128xf32, #tpu.memory_space<vmem>>, vector<1x128xf32>
    %4 = vector.broadcast %3 : vector<1x128xf32> to vector<128x128xf32>
    %5 = arith.mulf %2, %4 : vector<128x128xf32>
    %c0_5 = arith.constant 0 : index
    %c0_6 = arith.constant 0 : index
    %6 = vector.load %arg4[%c0_5, %c0_6] : memref<1x128xf32, #tpu.memory_space<vmem>>, vector<1x128xf32>
    %7 = vector.broadcast %6 : vector<1x128xf32> to vector<128x128xf32>
    %8 = arith.addf %5, %7 : vector<128x128xf32>
    %c0_7 = arith.constant 0 : index
    %c0_8 = arith.constant 0 : index
    %9 = vector.load %arg5[%c0_7, %c0_8] : memref<128x128xf32, #tpu.memory_space<vmem>>, vector<128x128xf32>
    %c0_9 = arith.constant 0 : index
    %c0_10 = arith.constant 0 : index
    %10 = vector.load %arg6[%c0_9, %c0_10] : memref<128x128xf32, #tpu.memory_space<vmem>>, vector<128x128xf32>
    %cst_11 = arith.constant dense<0.000000e+00> : vector<128x128xf32>
    %11 = tpu.matmul %9, %10, %cst_11 {dimension_numbers = #tpu.dot_dimension_numbers<[1], [0], [0], [1], [0, 0, 1, 1], [], []>} : vector<128x128xf32>, vector<128x128xf32>, vector<128x128xf32> -> vector<128x128xf32>
    %c0_12 = arith.constant 0 : index
    %c0_13 = arith.constant 0 : index
    %12 = vector.load %arg7[%c0_12, %c0_13] : memref<1x128xf32, #tpu.memory_space<vmem>>, vector<1x128xf32>
    %13 = vector.broadcast %12 : vector<1x128xf32> to vector<128x128xf32>
    %14 = arith.mulf %11, %13 : vector<128x128xf32>
    %c0_14 = arith.constant 0 : index
    %c0_15 = arith.constant 0 : index
    %15 = vector.load %arg8[%c0_14, %c0_15] : memref<1x128xf32, #tpu.memory_space<vmem>>, vector<1x128xf32>
    %16 = vector.broadcast %15 : vector<1x128xf32> to vector<128x128xf32>
    %17 = arith.addf %14, %16 : vector<128x128xf32>
    %18 = arith.addf %8, %17 : vector<128x128xf32>
    %cst_16 = arith.constant 0.000000e+00 : f32
    %19 = vector.broadcast %cst_16 : f32 to vector<128x128xf32>
    %20 = arith.maximumf %18, %19 : vector<128x128xf32>
    %c0_17 = arith.constant 0 : index
    %c0_18 = arith.constant 0 : index
    %21 = vector.load %arg9[%c0_17, %c0_18] : memref<128x128xf32, #tpu.memory_space<vmem>>, vector<128x128xf32>
    tpu.vector_store %arg9[%c0_17, %c0_18], %20 {strides = array<i32>} : memref<128x128xf32, #tpu.memory_space<vmem>>, vector<128x128xf32>,
    return
  }
  func.func @transform_0(%arg0: i32) -> (i32, i32) {
    %c0_i32 = arith.constant 0 : i32
    %c0_i32_0 = arith.constant 0 : i32
    return %arg0, %c0_i32 : i32, i32
  }
  func.func @transform_1(%arg0: i32) -> (i32, i32) {
    %c0_i32 = arith.constant 0 : i32
    %c0_i32_0 = arith.constant 0 : i32
    %c0_i32_1 = arith.constant 0 : i32
    return %c0_i32, %c0_i32_0 : i32, i32
  }
  func.func @transform_2(%arg0: i32) -> (i32, i32) {
    %c0_i32 = arith.constant 0 : i32
    %c0_i32_0 = arith.constant 0 : i32
    %c0_i32_1 = arith.constant 0 : i32
    return %c0_i32, %c0_i32_0 : i32, i32
  }
  func.func @transform_3(%arg0: i32) -> (i32, i32) {
    %c0_i32 = arith.constant 0 : i32
    %c0_i32_0 = arith.constant 0 : i32
    %c0_i32_1 = arith.constant 0 : i32
    return %c0_i32, %c0_i32_0 : i32, i32
  }
  func.func @transform_4(%arg0: i32) -> (i32, i32) {
    %c0_i32 = arith.constant 0 : i32
    %c0_i32_0 = arith.constant 0 : i32
    return %arg0, %c0_i32 : i32, i32
  }
  func.func @transform_5(%arg0: i32) -> (i32, i32) {
    %c0_i32 = arith.constant 0 : i32
    %c0_i32_0 = arith.constant 0 : i32
    %c0_i32_1 = arith.constant 0 : i32
    return %c0_i32, %c0_i32_0 : i32, i32
  }
  func.func @transform_6(%arg0: i32) -> (i32, i32) {
    %c0_i32 = arith.constant 0 : i32
    %c0_i32_0 = arith.constant 0 : i32
    %c0_i32_1 = arith.constant 0 : i32
    return %c0_i32, %c0_i32_0 : i32, i32
  }
  func.func @transform_7(%arg0: i32) -> (i32, i32) {
    %c0_i32 = arith.constant 0 : i32
    %c0_i32_0 = arith.constant 0 : i32
    %c0_i32_1 = arith.constant 0 : i32
    return %c0_i32, %c0_i32_0 : i32, i32
  }
  func.func @transform_8(%arg0: i32) -> (i32, i32) {
    %c0_i32 = arith.constant 0 : i32
    %c0_i32_0 = arith.constant 0 : i32
    return %arg0, %c0_i32 : i32, i32
  }
}

</mosaic_0001>

<llo_original>
// kernel: resnet_block_forward.2
$region0: #{resnet_block_forward.2}
  #allocation0 [shape = 'u32[]', space=smem, size = 0x4, offset = 0x4, fixed_abs, tag = 'smem constant byte address 0x4 - core index']
  #allocation1 [shape = 'u32[144,128]{1,0:T(1,128)}', space=vmem, size = 0x12000, scoped, tag = 'internal scratch']
  %s0 = inlined_call_operand.vmem [shape: f32[128,1152], index: 0, kind: input, shape index: {}]
  %s1 = inlined_call_operand.vmem [shape: f32[1152,128], index: 1, kind: input, shape index: {}]
  %s2 = inlined_call_operand.vmem [shape: f32[1,128], index: 2, kind: input, shape index: {}]
  %s3 = inlined_call_operand.vmem [shape: f32[1,128], index: 3, kind: input, shape index: {}]
  %s4 = inlined_call_operand.vmem [shape: f32[128,128], index: 4, kind: output, shape index: {}]
  %s5 = sld [smem:[#allocation0]]
  $region26: #{resnet_block_forward.2} parent=0
    _
  %s7 = ssub.s32 1, %s5
  %s8 = scalar_select 0, %s7, %s5
  // Predicated region
  $region2: #{resnet_block_forward.2} parent=0 // pred_check
    _
  $region3: #{resnet_block_forward.2} parent=0 // pred_check_branch
    %10 = sbr.rel (0) target = $region5
  $region4: #{resnet_block_forward.2} parent=0 // pred_region
    _
  $region5: #{resnet_block_forward.2} parent=0 // pred_fallthru
    _
  // Predicated region
  $region6: #{resnet_block_forward.2} parent=0 // pred_check
    _
  $region7: #{resnet_block_forward.2} parent=0 // pred_check_branch
    %12 = sbr.rel (0) target = $region9
  $region8: #{resnet_block_forward.2} parent=0 // pred_region
    _
  $region9: #{resnet_block_forward.2} parent=0 // pred_fallthru
    _
  // Predicated region
  $region10: #{resnet_block_forward.2} parent=0 // pred_check
    _
  $region11: #{resnet_block_forward.2} parent=0 // pred_check_branch
    %14 = sbr.rel (0) target = $region13
  $region12: #{resnet_block_forward.2} parent=0 // pred_region
    _
  $region13: #{resnet_block_forward.2} parent=0 // pred_fallthru
    _
  // Predicated region
  $region14: #{resnet_block_forward.2} parent=0 // pred_check
    _
  $region15: #{resnet_block_forward.2} parent=0 // pred_check_branch
    %16 = sbr.rel (0) target = $region17
  $region16: #{resnet_block_forward.2} parent=0 // pred_region
    _
  $region17: #{resnet_block_forward.2} parent=0 // pred_fallthru
    _
  %v17 = vld [vmem:[%s0] sm:$0xff]
  %v18 = vld [vmem:[%s0 + $0x8] sm:$0xff]
  %v19 = vld [vmem:[%s0 + $0x10] sm:$0xff]
  %v20 = vld [vmem:[%s0 + $0x18] sm:$0xff]
  %v21 = vld [vmem:[%s0 + $0x20] sm:$0xff]
  %v22 = vld [vmem:[%s0 + $0x28] sm:$0xff]
  %v23 = vld [vmem:[%s0 + $0x30] sm:$0xff]
  %v24 = vld [vmem:[%s0 + $0x38] sm:$0xff]
  %v25 = vld [vmem:[%s0 + $0x40] sm:$0xff]
  %v26 = vld [vmem:[%s0 + $0x48] sm:$0xff]
  %v27 = vld [vmem:[%s0 + $0x50] sm:$0xff]
  %v28 = vld [vmem:[%s0 + $0x58] sm:$0xff]
  %v29 = vld [vmem:[%s0 + $0x60] sm:$0xff]
  %v30 = vld [vmem:[%s0 + $0x68] sm:$0xff]
  %v31 = vld [vmem:[%s0 + $0x70] sm:$0xff]
  %v32 = vld [vmem:[%s0 + $0x78] sm:$0xff]
  %v33 = vld [vmem:[%s0 + $0x80] sm:$0xff]
  %v34 = vld [vmem:[%s0 + $0x88] sm:$0xff]
  %v35 = vld [vmem:[%s0 + $0x90] sm:$0xff]
  %v36 = vld [vmem:[%s0 + $0x98] sm:$0xff]
  %v37 = vld [vmem:[%s0 + $0xa0] sm:$0xff]
  %v38 = vld [vmem:[%s0 + $0xa8] sm:$0xff]
  %v39 = vld [vmem:[%s0 + $0xb0] sm:$0xff]
  %v40 = vld [vmem:[%s0 + $0xb8] sm:$0xff]
  %v41 = vld [vmem:[%s0 + $0xc0] sm:$0xff]
  %v42 = vld [vmem:[%s0 + $0xc8] sm:$0xff]
  %v43 = vld [vmem:[%s0 + $0xd0] sm:$0xff]
  %v44 = vld [vmem:[%s0 + $0xd8] sm:$0xff]
  %v45 = vld [vmem:[%s0 + $0xe0] sm:$0xff]
  %v46 = vld [vmem:[%s0 + $0xe8] sm:$0xff]
  %v47 = vld [vmem:[%s0 + $0xf0] sm:$0xff]
  %v48 = vld [vmem:[%s0 + $0xf8] sm:$0xff]
  %v49 = vld [vmem:[%s0 + $0x100] sm:$0xff]
  %v50 = vld [vmem:[%s0 + $0x108] sm:$0xff]
  %v51 = vld [vmem:[%s0 + $0x110] sm:$0xff]
  %v52 = vld [vmem:[%s0 + $0x118] sm:$0xff]
  %v53 = vld [vmem:[%s0 + $0x120] sm:$0xff]
  %v54 = vld [vmem:[%s0 + $0x128] sm:$0xff]
  %v55 = vld [vmem:[%s0 + $0x130] sm:$0xff]
  %v56 = vld [vmem:[%s0 + $0x138] sm:$0xff]
  %v57 = vld [vmem:[%s0 + $0x140] sm:$0xff]
  %v58 = vld [vmem:[%s0 + $0x148] sm:$0xff]
  %v59 = vld [vmem:[%s0 + $0x150] sm:$0xff]
  %v60 = vld [vmem:[%s0 + $0x158] sm:$0xff]
  %v61 = vld [vmem:[%s0 + $0x160] sm:$0xff]
  %v62 = vld [vmem:[%s0 + $0x168] sm:$0xff]
  %v63 = vld [vmem:[%s0 + $0x170] sm:$0xff]
  %v64 = vld [vmem:[%s0 + $0x178] sm:$0xff]
  %v65 = vld [vmem:[%s0 + $0x180] sm:$0xff]
  %v66 = vld [vmem:[%s0 + $0x188] sm:$0xff]
  %v67 = vld [vmem:[%s0 + $0x190] sm:$0xff]
  %v68 = vld [vmem:[%s0 + $0x198] sm:$0xff]
  %v69 = vld [vmem:[%s0 + $0x1a0] sm:$0xff]
  %v70 = vld [vmem:[%s0 + $0x1a8] sm:$0xff]
  %v71 = vld [vmem:[%s0 + $0x1b0] sm:$0xff]
  %v72 = vld [vmem:[%s0 + $0x1b8] sm:$0xff]
  %v73 = vld [vmem:[%s0 + $0x1c0] sm:$0xff]
  %v74 = vld [vmem:[%s0 + $0x1c8] sm:$0xff]
  %v75 = vld [vmem:[%s0 + $0x1d0] sm:$0xff]
  %v76 = vld [vmem:[%s0 + $0x1d8] sm:$0xff]
  %v77 = vld [vmem:[%s0 + $0x1e0] sm:$0xff]
  %v78 = vld [vmem:[%s0 + $0x1e8] sm:$0xff]
  %v79 = vld [vmem:[%s0 + $0x1f0] sm:$0xff]
  %v80 = vld [vmem:[%s0 + $0x1f8] sm:$0xff]
  %v81 = vld [vmem:[%s0 + $0x200] sm:$0xff]
  %v82 = vld [vmem:[%s0 + $0x208] sm:$0xff]
  %v83 = vld [vmem:[%s0 + $0x210] sm:$0xff]
  %v84 = vld [vmem:[%s0 + $0x218] sm:$0xff]
  %v85 = vld [vmem:[%s0 + $0x220] sm:$0xff]
  %v86 = vld [vmem:[%s0 + $0x228] sm:$0xff]
  %v87 = vld [vmem:[%s0 + $0x230] sm:$0xff]
  %v88 = vld [vmem:[%s0 + $0x238] sm:$0xff]
  %v89 = vld [vmem:[%s0 + $0x240] sm:$0xff]
  %v90 = vld [vmem:[%s0 + $0x248] sm:$0xff]
  %v91 = vld [vmem:[%s0 + $0x250] sm:$0xff]
  %v92 = vld [vmem:[%s0 + $0x258] sm:$0xff]
  %v93 = vld [vmem:[%s0 + $0x260] sm:$0xff]
  %v94 = vld [vmem:[%s0 + $0x268] sm:$0xff]
  %v95 = vld [vmem:[%s0 + $0x270] sm:$0xff]
  %v96 = vld [vmem:[%s0 + $0x278] sm:$0xff]
  %v97 = vld [vmem:[%s0 + $0x280] sm:$0xff]
  %v98 = vld [vmem:[%s0 + $0x288] sm:$0xff]
  %v99 = vld [vmem:[%s0 + $0x290] sm:$0xff]
  %v100 = vld [vmem:[%s0 + $0x298] sm:$0xff]
  %v101 = vld [vmem:[%s0 + $0x2a0] sm:$0xff]
  %v102 = vld [vmem:[%s0 + $0x2a8] sm:$0xff]
  %v103 = vld [vmem:[%s0 + $0x2b0] sm:$0xff]
  %v104 = vld [vmem:[%s0 + $0x2b8] sm:$0xff]
  %v105 = vld [vmem:[%s0 + $0x2c0] sm:$0xff]
  %v106 = vld [vmem:[%s0 + $0x2c8] sm:$0xff]
  %v107 = vld [vmem:[%s0 + $0x2d0] sm:$0xff]
  %v108 = vld [vmem:[%s0 + $0x2d8] sm:$0xff]
  %v109 = vld [vmem:[%s0 + $0x2e0] sm:$0xff]
  %v110 = vld [vmem:[%s0 + $0x2e8] sm:$0xff]
  %v111 = vld [vmem:[%s0 + $0x2f0] sm:$0xff]
  %v112 = vld [vmem:[%s0 + $0x2f8] sm:$0xff]
  %v113 = vld [vmem:[%s0 + $0x300] sm:$0xff]
  %v114 = vld [vmem:[%s0 + $0x308] sm:$0xff]
  %v115 = vld [vmem:[%s0 + $0x310] sm:$0xff]
  %v116 = vld [vmem:[%s0 + $0x318] sm:$0xff]
  %v117 = vld [vmem:[%s0 + $0x320] sm:$0xff]
  %v118 = vld [vmem:[%s0 + $0x328] sm:$0xff]
  %v119 = vld [vmem:[%s0 + $0x330] sm:$0xff]
  %v120 = vld [vmem:[%s0 + $0x338] sm:$0xff]
  %v121 = vld [vmem:[%s0 + $0x340] sm:$0xff]
  %v122 = vld [vmem:[%s0 + $0x348] sm:$0xff]
  %v123 = vld [vmem:[%s0 + $0x350] sm:$0xff]
  %v124 = vld [vmem:[%s0 + $0x358] sm:$0xff]
  %v125 = vld [vmem:[%s0 + $0x360] sm:$0xff]
  %v126 = vld [vmem:[%s0 + $0x368] sm:$0xff]
  %v127 = vld [vmem:[%s0 + $0x370] sm:$0xff]
  %v128 = vld [vmem:[%s0 + $0x378] sm:$0xff]
  %v129 = vld [vmem:[%s0 + $0x380] sm:$0xff]
  %v130 = vld [vmem:[%s0 + $0x388] sm:$0xff]
  %v131 = vld [vmem:[%s0 + $0x390] sm:$0xff]
  %v132 = vld [vmem:[%s0 + $0x398] sm:$0xff]
  %v133 = vld [vmem:[%s0 + $0x3a0] sm:$0xff]
  %v134 = vld [vmem:[%s0 + $0x3a8] sm:$0xff]
  %v135 = vld [vmem:[%s0 + $0x3b0] sm:$0xff]
  %v136 = vld [vmem:[%s0 + $0x3b8] sm:$0xff]
  %v137 = vld [vmem:[%s0 + $0x3c0] sm:$0xff]
  %v138 = vld [vmem:[%s0 + $0x3c8] sm:$0xff]
  %v139 = vld [vmem:[%s0 + $0x3d0] sm:$0xff]
  %v140 = vld [vmem:[%s0 + $0x3d8] sm:$0xff]
  %v141 = vld [vmem:[%s0 + $0x3e0] sm:$0xff]
  %v142 = vld [vmem:[%s0 + $0x3e8] sm:$0xff]
  %v143 = vld [vmem:[%s0 + $0x3f0] sm:$0xff]
  %v144 = vld [vmem:[%s0 + $0x3f8] sm:$0xff]
  %v145 = vld [vmem:[%s0 + $0x400] sm:$0xff]
  %v146 = vld [vmem:[%s0 + $0x408] sm:$0xff]
  %v147 = vld [vmem:[%s0 + $0x410] sm:$0xff]
  %v148 = vld [vmem:[%s0 + $0x418] sm:$0xff]
  %v149 = vld [vmem:[%s0 + $0x420] sm:$0xff]
  %v150 = vld [vmem:[%s0 + $0x428] sm:$0xff]
  %v151 = vld [vmem:[%s0 + $0x430] sm:$0xff]
  %v152 = vld [vmem:[%s0 + $0x438] sm:$0xff]
  %v153 = vld [vmem:[%s0 + $0x440] sm:$0xff]
  %v154 = vld [vmem:[%s0 + $0x448] sm:$0xff]
  %v155 = vld [vmem:[%s0 + $0x450] sm:$0xff]
  %v156 = vld [vmem:[%s0 + $0x458] sm:$0xff]
  %v157 = vld [vmem:[%s0 + $0x460] sm:$0xff]
  %v158 = vld [vmem:[%s0 + $0x468] sm:$0xff]
  %v159 = vld [vmem:[%s0 + $0x470] sm:$0xff]
  %v160 = vld [vmem:[%s0 + $0x478] sm:$0xff]
  %v161 = vld [vmem:[%s1] sm:$0xff]
  %v162 = vld [vmem:[%s1 + $0x8] sm:$0xff]
  %v163 = vld [vmem:[%s1 + $0x10] sm:$0xff]
  %v164 = vld [vmem:[%s1 + $0x18] sm:$0xff]
  %v165 = vld [vmem:[%s1 + $0x20] sm:$0xff]
  %v166 = vld [vmem:[%s1 + $0x28] sm:$0xff]
  %v167 = vld [vmem:[%s1 + $0x30] sm:$0xff]
  %v168 = vld [vmem:[%s1 + $0x38] sm:$0xff]
  %v169 = vld [vmem:[%s1 + $0x40] sm:$0xff]
  %v170 = vld [vmem:[%s1 + $0x48] sm:$0xff]
  %v171 = vld [vmem:[%s1 + $0x50] sm:$0xff]
  %v172 = vld [vmem:[%s1 + $0x58] sm:$0xff]
  %v173 = vld [vmem:[%s1 + $0x60] sm:$0xff]
  %v174 = vld [vmem:[%s1 + $0x68] sm:$0xff]
  %v175 = vld [vmem:[%s1 + $0x70] sm:$0xff]
  %v176 = vld [vmem:[%s1 + $0x78] sm:$0xff]
  %v177 = vld [vmem:[%s1 + $0x80] sm:$0xff]
  %v178 = vld [vmem:[%s1 + $0x88] sm:$0xff]
  %v179 = vld [vmem:[%s1 + $0x90] sm:$0xff]
  %v180 = vld [vmem:[%s1 + $0x98] sm:$0xff]
  %v181 = vld [vmem:[%s1 + $0xa0] sm:$0xff]
  %v182 = vld [vmem:[%s1 + $0xa8] sm:$0xff]
  %v183 = vld [vmem:[%s1 + $0xb0] sm:$0xff]
  %v184 = vld [vmem:[%s1 + $0xb8] sm:$0xff]
  %v185 = vld [vmem:[%s1 + $0xc0] sm:$0xff]
  %v186 = vld [vmem:[%s1 + $0xc8] sm:$0xff]
  %v187 = vld [vmem:[%s1 + $0xd0] sm:$0xff]
  %v188 = vld [vmem:[%s1 + $0xd8] sm:$0xff]
  %v189 = vld [vmem:[%s1 + $0xe0] sm:$0xff]
  %v190 = vld [vmem:[%s1 + $0xe8] sm:$0xff]
  %v191 = vld [vmem:[%s1 + $0xf0] sm:$0xff]
  %v192 = vld [vmem:[%s1 + $0xf8] sm:$0xff]
  %v193 = vld [vmem:[%s1 + $0x100] sm:$0xff]
  %v194 = vld [vmem:[%s1 + $0x108] sm:$0xff]
  %v195 = vld [vmem:[%s1 + $0x110] sm:$0xff]
  %v196 = vld [vmem:[%s1 + $0x118] sm:$0xff]
  %v197 = vld [vmem:[%s1 + $0x120] sm:$0xff]
  %v198 = vld [vmem:[%s1 + $0x128] sm:$0xff]
  %v199 = vld [vmem:[%s1 + $0x130] sm:$0xff]
  %v200 = vld [vmem:[%s1 + $0x138] sm:$0xff]
  %v201 = vld [vmem:[%s1 + $0x140] sm:$0xff]
  %v202 = vld [vmem:[%s1 + $0x148] sm:$0xff]
  %v203 = vld [vmem:[%s1 + $0x150] sm:$0xff]
  %v204 = vld [vmem:[%s1 + $0x158] sm:$0xff]
  %v205 = vld [vmem:[%s1 + $0x160] sm:$0xff]
  %v206 = vld [vmem:[%s1 + $0x168] sm:$0xff]
  %v207 = vld [vmem:[%s1 + $0x170] sm:$0xff]
  %v208 = vld [vmem:[%s1 + $0x178] sm:$0xff]
  %v209 = vld [vmem:[%s1 + $0x180] sm:$0xff]
  %v210 = vld [vmem:[%s1 + $0x188] sm:$0xff]
  %v211 = vld [vmem:[%s1 + $0x190] sm:$0xff]
  %v212 = vld [vmem:[%s1 + $0x198] sm:$0xff]
  %v213 = vld [vmem:[%s1 + $0x1a0] sm:$0xff]
  %v214 = vld [vmem:[%s1 + $0x1a8] sm:$0xff]
  %v215 = vld [vmem:[%s1 + $0x1b0] sm:$0xff]
  %v216 = vld [vmem:[%s1 + $0x1b8] sm:$0xff]
  %v217 = vld [vmem:[%s1 + $0x1c0] sm:$0xff]
  %v218 = vld [vmem:[%s1 + $0x1c8] sm:$0xff]
  %v219 = vld [vmem:[%s1 + $0x1d0] sm:$0xff]
  %v220 = vld [vmem:[%s1 + $0x1d8] sm:$0xff]
  %v221 = vld [vmem:[%s1 + $0x1e0] sm:$0xff]
  %v222 = vld [vmem:[%s1 + $0x1e8] sm:$0xff]
  %v223 = vld [vmem:[%s1 + $0x1f0] sm:$0xff]
  %v224 = vld [vmem:[%s1 + $0x1f8] sm:$0xff]
  %v225 = vld [vmem:[%s1 + $0x200] sm:$0xff]
  %v226 = vld [vmem:[%s1 + $0x208] sm:$0xff]
  %v227 = vld [vmem:[%s1 + $0x210] sm:$0xff]
  %v228 = vld [vmem:[%s1 + $0x218] sm:$0xff]
  %v229 = vld [vmem:[%s1 + $0x220] sm:$0xff]
  %v230 = vld [vmem:[%s1 + $0x228] sm:$0xff]
  %v231 = vld [vmem:[%s1 + $0x230] sm:$0xff]
  %v232 = vld [vmem:[%s1 + $0x238] sm:$0xff]
  %v233 = vld [vmem:[%s1 + $0x240] sm:$0xff]
  %v234 = vld [vmem:[%s1 + $0x248] sm:$0xff]
  %v235 = vld [vmem:[%s1 + $0x250] sm:$0xff]
  %v236 = vld [vmem:[%s1 + $0x258] sm:$0xff]
  %v237 = vld [vmem:[%s1 + $0x260] sm:$0xff]
  %v238 = vld [vmem:[%s1 + $0x268] sm:$0xff]
  %v239 = vld [vmem:[%s1 + $0x270] sm:$0xff]
  %v240 = vld [vmem:[%s1 + $0x278] sm:$0xff]
  %v241 = vld [vmem:[%s1 + $0x280] sm:$0xff]
  %v242 = vld [vmem:[%s1 + $0x288] sm:$0xff]
  %v243 = vld [vmem:[%s1 + $0x290] sm:$0xff]
  %v244 = vld [vmem:[%s1 + $0x298] sm:$0xff]
  %v245 = vld [vmem:[%s1 + $0x2a0] sm:$0xff]
  %v246 = vld [vmem:[%s1 + $0x2a8] sm:$0xff]
  %v247 = vld [vmem:[%s1 + $0x2b0] sm:$0xff]
  %v248 = vld [vmem:[%s1 + $0x2b8] sm:$0xff]
  %v249 = vld [vmem:[%s1 + $0x2c0] sm:$0xff]
  %v250 = vld [vmem:[%s1 + $0x2c8] sm:$0xff]
  %v251 = vld [vmem:[%s1 + $0x2d0] sm:$0xff]
  %v252 = vld [vmem:[%s1 + $0x2d8] sm:$0xff]
  %v253 = vld [vmem:[%s1 + $0x2e0] sm:$0xff]
  %v254 = vld [vmem:[%s1 + $0x2e8] sm:$0xff]
  %v255 = vld [vmem:[%s1 + $0x2f0] sm:$0xff]
  %v256 = vld [vmem:[%s1 + $0x2f8] sm:$0xff]
  %v257 = vld [vmem:[%s1 + $0x300] sm:$0xff]
  %v258 = vld [vmem:[%s1 + $0x308] sm:$0xff]
  %v259 = vld [vmem:[%s1 + $0x310] sm:$0xff]
  %v260 = vld [vmem:[%s1 + $0x318] sm:$0xff]
  %v261 = vld [vmem:[%s1 + $0x320] sm:$0xff]
  %v262 = vld [vmem:[%s1 + $0x328] sm:$0xff]
  %v263 = vld [vmem:[%s1 + $0x330] sm:$0xff]
  %v264 = vld [vmem:[%s1 + $0x338] sm:$0xff]
  %v265 = vld [vmem:[%s1 + $0x340] sm:$0xff]
  %v266 = vld [vmem:[%s1 + $0x348] sm:$0xff]
  %v267 = vld [vmem:[%s1 + $0x350] sm:$0xff]
  %v268 = vld [vmem:[%s1 + $0x358] sm:$0xff]
  %v269 = vld [vmem:[%s1 + $0x360] sm:$0xff]
  %v270 = vld [vmem:[%s1 + $0x368] sm:$0xff]
  %v271 = vld [vmem:[%s1 + $0x370] sm:$0xff]
  %v272 = vld [vmem:[%s1 + $0x378] sm:$0xff]
  %v273 = vld [vmem:[%s1 + $0x380] sm:$0xff]
  %v274 = vld [vmem:[%s1 + $0x388] sm:$0xff]
  %v275 = vld [vmem:[%s1 + $0x390] sm:$0xff]
  %v276 = vld [vmem:[%s1 + $0x398] sm:$0xff]
  %v277 = vld [vmem:[%s1 + $0x3a0] sm:$0xff]
  %v278 = vld [vmem:[%s1 + $0x3a8] sm:$0xff]
  %v279 = vld [vmem:[%s1 + $0x3b0] sm:$0xff]
  %v280 = vld [vmem:[%s1 + $0x3b8] sm:$0xff]
  %v281 = vld [vmem:[%s1 + $0x3c0] sm:$0xff]
  %v282 = vld [vmem:[%s1 + $0x3c8] sm:$0xff]
  %v283 = vld [vmem:[%s1 + $0x3d0] sm:$0xff]
  %v284 = vld [vmem:[%s1 + $0x3d8] sm:$0xff]
  %v285 = vld [vmem:[%s1 + $0x3e0] sm:$0xff]
  %v286 = vld [vmem:[%s1 + $0x3e8] sm:$0xff]
  %v287 = vld [vmem:[%s1 + $0x3f0] sm:$0xff]
  %v288 = vld [vmem:[%s1 + $0x3f8] sm:$0xff]
  %v289 = vld [vmem:[%s1 + $0x400] sm:$0xff]
  %v290 = vld [vmem:[%s1 + $0x408] sm:$0xff]
  %v291 = vld [vmem:[%s1 + $0x410] sm:$0xff]
  %v292 = vld [vmem:[%s1 + $0x418] sm:$0xff]
  %v293 = vld [vmem:[%s1 + $0x420] sm:$0xff]
  %v294 = vld [vmem:[%s1 + $0x428] sm:$0xff]
  %v295 = vld [vmem:[%s1 + $0x430] sm:$0xff]
  %v296 = vld [vmem:[%s1 + $0x438] sm:$0xff]
  %v297 = vld [vmem:[%s1 + $0x440] sm:$0xff]
  %v298 = vld [vmem:[%s1 + $0x448] sm:$0xff]
  %v299 = vld [vmem:[%s1 + $0x450] sm:$0xff]
  %v300 = vld [vmem:[%s1 + $0x458] sm:$0xff]
  %v301 = vld [vmem:[%s1 + $0x460] sm:$0xff]
  %v302 = vld [vmem:[%s1 + $0x468] sm:$0xff]
  %v303 = vld [vmem:[%s1 + $0x470] sm:$0xff]
  %v304 = vld [vmem:[%s1 + $0x478] sm:$0xff]
  %305 = vmatprep.subr.mxu0 0.0
  %306 = vmatpush1.msra.mxu0 %v176
  %307 = vmatprep.subr.mxu0 0.0
  %308 = vmatpush1.msra.mxu0 %v175
  %309 = vmatprep.subr.mxu0 0.0
  %310 = vmatpush1.msra.mxu0 %v174
  %311 = vmatprep.subr.mxu0 0.0
  %312 = vmatpush1.msra.mxu0 %v173
  %313 = vmatprep.subr.mxu0 0.0
  %314 = vmatpush1.msra.mxu0 %v172
  %315 = vmatprep.subr.mxu0 0.0
  %316 = vmatpush1.msra.mxu0 %v171
  %317 = vmatprep.subr.mxu0 0.0
  %318 = vmatpush1.msra.mxu0 %v170
  %319 = vmatprep.subr.mxu0 0.0
  %320 = vmatpush1.msra.mxu0 %v169
  %321 = vmatprep.subr.mxu0 0.0
  %322 = vmatpush1.msra.mxu0 %v168
  %323 = vmatprep.subr.mxu0 0.0
  %324 = vmatpush1.msra.mxu0 %v167
  %325 = vmatprep.subr.mxu0 0.0
  %326 = vmatpush1.msra.mxu0 %v166
  %327 = vmatprep.subr.mxu0 0.0
  %328 = vmatpush1.msra.mxu0 %v165
  %329 = vmatprep.subr.mxu0 0.0
  %330 = vmatpush1.msra.mxu0 %v164
  %331 = vmatprep.subr.mxu0 0.0
  %332 = vmatpush1.msra.mxu0 %v163
  %333 = vmatprep.subr.mxu0 0.0
  %334 = vmatpush1.msra.mxu0 %v162
  %335 = vmatprep.subr.mxu0 0.0
  %336 = vmatpush1.msra.mxu0 %v161
  %337 = vmatprep.subr.mxu0 0.0
  %338 = vmatpush2.msra.mxu0 %v192
  %339 = vmatprep.subr.mxu0 0.0
  %340 = vmatpush2.msra.mxu0 %v191
  %341 = vmatprep.subr.mxu0 0.0
  %342 = vmatpush2.msra.mxu0 %v190
  %343 = vmatprep.subr.mxu0 0.0
  %344 = vmatpush2.msra.mxu0 %v189
  %345 = vmatprep.subr.mxu0 0.0
  %346 = vmatpush2.msra.mxu0 %v188
  %347 = vmatprep.subr.mxu0 0.0
  %348 = vmatpush2.msra.mxu0 %v187
  %349 = vmatprep.subr.mxu0 0.0
  %350 = vmatpush2.msra.mxu0 %v186
  %351 = vmatprep.subr.mxu0 0.0
  %352 = vmatpush2.msra.mxu0 %v185
  %353 = vmatprep.subr.mxu0 0.0
  %354 = vmatpush2.msra.mxu0 %v184
  %355 = vmatprep.subr.mxu0 0.0
  %356 = vmatpush2.msra.mxu0 %v183
  %357 = vmatprep.subr.mxu0 0.0
  %358 = vmatpush2.msra.mxu0 %v182
  %359 = vmatprep.subr.mxu0 0.0
  %360 = vmatpush2.msra.mxu0 %v181
  %361 = vmatprep.subr.mxu0 0.0
  %362 = vmatpush2.msra.mxu0 %v180
  %363 = vmatprep.subr.mxu0 0.0
  %364 = vmatpush2.msra.mxu0 %v179
  %365 = vmatprep.subr.mxu0 0.0
  %366 = vmatpush2.msra.mxu0 %v178
  %367 = vmatprep.subr.mxu0 0.0
  %368 = vmatpush2.msra.mxu0 %v177
  %369 = vmatprep.mubr.f32.mxu0 %v18
  %370 = vmatmul.mubr.f32.gmra.mxu0 %v17
  %v371 = vpop.f32.mrf.mxu0
  %v372 = vadd.f32 0.0, %v371
  %v373 = vpop.f32.mrf.mxu0
  %374 = vmatprep.mubr.f32.mxu0 %v27
  %375 = vmatmul.mubr.f32.gmra.mxu0 %v26
  %v376 = vpop.f32.mrf.mxu0
  %v377 = vadd.f32 0.0, %v376
  %v378 = vpop.f32.mrf.mxu0
  %379 = vmatprep.mubr.f32.mxu0 %v36
  %380 = vmatmul.mubr.f32.gmra.mxu0 %v35
  %v381 = vpop.f32.mrf.mxu0
  %v382 = vadd.f32 0.0, %v381
  %v383 = vpop.f32.mrf.mxu0
  %384 = vmatprep.mubr.f32.mxu0 %v45
  %385 = vmatmul.mubr.f32.gmra.mxu0 %v44
  %v386 = vpop.f32.mrf.mxu0
  %v387 = vadd.f32 0.0, %v386
  %v388 = vpop.f32.mrf.mxu0
  %389 = vmatprep.mubr.f32.mxu0 %v54
  %390 = vmatmul.mubr.f32.gmra.mxu0 %v53
  %v391 = vpop.f32.mrf.mxu0
  %v392 = vadd.f32 0.0, %v391
  %v393 = vpop.f32.mrf.mxu0
  %394 = vmatprep.mubr.f32.mxu0 %v63
  %395 = vmatmul.mubr.f32.gmra.mxu0 %v62
  %v396 = vpop.f32.mrf.mxu0
  %v397 = vadd.f32 0.0, %v396
  %v398 = vpop.f32.mrf.mxu0
  %399 = vmatprep.mubr.f32.mxu0 %v72
  %400 = vmatmul.mubr.f32.gmra.mxu0 %v71
  %v401 = vpop.f32.mrf.mxu0
  %v402 = vadd.f32 0.0, %v401
  %v403 = vpop.f32.mrf.mxu0
  %404 = vmatprep.mubr.f32.mxu0 %v81
  %405 = vmatmul.mubr.f32.gmra.mxu0 %v80
  %v406 = vpop.f32.mrf.mxu0
  %v407 = vadd.f32 0.0, %v406
  %v408 = vpop.f32.mrf.mxu0
  %409 = vmatprep.mubr.f32.mxu0 %v90
  %410 = vmatmul.mubr.f32.gmra.mxu0 %v89
  %v411 = vpop.f32.mrf.mxu0
  %v412 = vadd.f32 0.0, %v411
  %v413 = vpop.f32.mrf.mxu0
  %414 = vmatprep.mubr.f32.mxu0 %v99
  %415 = vmatmul.mubr.f32.gmra.mxu0 %v98
  %v416 = vpop.f32.mrf.mxu0
  %v417 = vadd.f32 0.0, %v416
  %v418 = vpop.f32.mrf.mxu0
  %419 = vmatprep.mubr.f32.mxu0 %v108
  %420 = vmatmul.mubr.f32.gmra.mxu0 %v107
  %v421 = vpop.f32.mrf.mxu0
  %v422 = vadd.f32 0.0, %v421
  %v423 = vpop.f32.mrf.mxu0
  %424 = vmatprep.mubr.f32.mxu0 %v117
  %425 = vmatmul.mubr.f32.gmra.mxu0 %v116
  %v426 = vpop.f32.mrf.mxu0
  %v427 = vadd.f32 0.0, %v426
  %v428 = vpop.f32.mrf.mxu0
  %429 = vmatprep.mubr.f32.mxu0 %v126
  %430 = vmatmul.mubr.f32.gmra.mxu0 %v125
  %v431 = vpop.f32.mrf.mxu0
  %v432 = vadd.f32 0.0, %v431
  %v433 = vpop.f32.mrf.mxu0
  %434 = vmatprep.mubr.f32.mxu0 %v135
  %435 = vmatmul.mubr.f32.gmra.mxu0 %v134
  %v436 = vpop.f32.mrf.mxu0
  %v437 = vadd.f32 0.0, %v436
  %v438 = vpop.f32.mrf.mxu0
  %439 = vmatprep.mubr.f32.mxu0 %v144
  %440 = vmatmul.mubr.f32.gmra.mxu0 %v143
  %v441 = vpop.f32.mrf.mxu0
  %v442 = vadd.f32 0.0, %v441
  %v443 = vpop.f32.mrf.mxu0
  %444 = vmatprep.mubr.f32.mxu0 %v153
  %445 = vmatmul.mubr.f32.gmra.mxu0 %v152
  %v446 = vpop.f32.mrf.mxu0
  %v447 = vadd.f32 0.0, %v446
  %v448 = vpop.f32.mrf.mxu0
  %449 = vdwg.mxu0
  %450 = vmatprep.subr.mxu0 0.0
  %451 = vmatpush1.msra.mxu0 %v208
  %452 = vmatprep.subr.mxu0 0.0
  %453 = vmatpush1.msra.mxu0 %v207
  %454 = vmatprep.subr.mxu0 0.0
  %455 = vmatpush1.msra.mxu0 %v206
  %456 = vmatprep.subr.mxu0 0.0
  %457 = vmatpush1.msra.mxu0 %v205
  %458 = vmatprep.subr.mxu0 0.0
  %459 = vmatpush1.msra.mxu0 %v204
  %460 = vmatprep.subr.mxu0 0.0
  %461 = vmatpush1.msra.mxu0 %v203
  %462 = vmatprep.subr.mxu0 0.0
  %463 = vmatpush1.msra.mxu0 %v202
  %464 = vmatprep.subr.mxu0 0.0
  %465 = vmatpush1.msra.mxu0 %v201
  %466 = vmatprep.subr.mxu0 0.0
  %467 = vmatpush1.msra.mxu0 %v200
  %468 = vmatprep.subr.mxu0 0.0
  %469 = vmatpush1.msra.mxu0 %v199
  %470 = vmatprep.subr.mxu0 0.0
  %471 = vmatpush1.msra.mxu0 %v198
  %472 = vmatprep.subr.mxu0 0.0
  %473 = vmatpush1.msra.mxu0 %v197
  %474 = vmatprep.subr.mxu0 0.0
  %475 = vmatpush1.msra.mxu0 %v196
  %476 = vmatprep.subr.mxu0 0.0
  %477 = vmatpush1.msra.mxu0 %v195
  %478 = vmatprep.subr.mxu0 0.0
  %479 = vmatpush1.msra.mxu0 %v194
  %480 = vmatprep.subr.mxu0 0.0
  %481 = vmatpush1.msra.mxu0 %v193
  %482 = vmatprep.subr.mxu0 0.0
  %483 = vmatpush2.msra.mxu0 %v224
  %484 = vmatprep.subr.mxu0 0.0
  %485 = vmatpush2.msra.mxu0 %v223
  %486 = vmatprep.subr.mxu0 0.0
  %487 = vmatpush2.msra.mxu0 %v222
  %488 = vmatprep.subr.mxu0 0.0
  %489 = vmatpush2.msra.mxu0 %v221
  %490 = vmatprep.subr.mxu0 0.0
  %491 = vmatpush2.msra.mxu0 %v220
  %492 = vmatprep.subr.mxu0 0.0
  %493 = vmatpush2.msra.mxu0 %v219
  %494 = vmatprep.subr.mxu0 0.0
  %495 = vmatpush2.msra.mxu0 %v218
  %496 = vmatprep.subr.mxu0 0.0
  %497 = vmatpush2.msra.mxu0 %v217
  %498 = vmatprep.subr.mxu0 0.0
  %499 = vmatpush2.msra.mxu0 %v216
  %500 = vmatprep.subr.mxu0 0.0
  %501 = vmatpush2.msra.mxu0 %v215
  %502 = vmatprep.subr.mxu0 0.0
  %503 = vmatpush2.msra.mxu0 %v214
  %504 = vmatprep.subr.mxu0 0.0
  %505 = vmatpush2.msra.mxu0 %v213
  %506 = vmatprep.subr.mxu0 0.0
  %507 = vmatpush2.msra.mxu0 %v212
  %508 = vmatprep.subr.mxu0 0.0
  %509 = vmatpush2.msra.mxu0 %v211
  %510 = vmatprep.subr.mxu0 0.0
  %511 = vmatpush2.msra.mxu0 %v210
  %512 = vmatprep.subr.mxu0 0.0
  %513 = vmatpush2.msra.mxu0 %v209
  %514 = vmatprep.mubr.f32.mxu0 %v20
  %515 = vmatmul.mubr.f32.gmra.mxu0 %v19
  %v516 = vpop.f32.mrf.mxu0
  %v517 = vadd.f32 %v372, %v516
  %v518 = vpop.f32.mrf.mxu0
  %519 = vmatprep.mubr.f32.mxu0 %v29
  %520 = vmatmul.mubr.f32.gmra.mxu0 %v28
  %v521 = vpop.f32.mrf.mxu0
  %v522 = vadd.f32 %v377, %v521
  %v523 = vpop.f32.mrf.mxu0
  %524 = vmatprep.mubr.f32.mxu0 %v38
  %525 = vmatmul.mubr.f32.gmra.mxu0 %v37
  %v526 = vpop.f32.mrf.mxu0
  %v527 = vadd.f32 %v382, %v526
  %v528 = vpop.f32.mrf.mxu0
  %529 = vmatprep.mubr.f32.mxu0 %v47
  %530 = vmatmul.mubr.f32.gmra.mxu0 %v46
  %v531 = vpop.f32.mrf.mxu0
  %v532 = vadd.f32 %v387, %v531
  %v533 = vpop.f32.mrf.mxu0
  %534 = vmatprep.mubr.f32.mxu0 %v56
  %535 = vmatmul.mubr.f32.gmra.mxu0 %v55
  %v536 = vpop.f32.mrf.mxu0
  %v537 = vadd.f32 %v392, %v536
  %v538 = vpop.f32.mrf.mxu0
  %539 = vmatprep.mubr.f32.mxu0 %v65
  %540 = vmatmul.mubr.f32.gmra.mxu0 %v64
  %v541 = vpop.f32.mrf.mxu0
  %v542 = vadd.f32 %v397, %v541
  %v543 = vpop.f32.mrf.mxu0
  %544 = vmatprep.mubr.f32.mxu0 %v74
  %545 = vmatmul.mubr.f32.gmra.mxu0 %v73
  %v546 = vpop.f32.mrf.mxu0
  %v547 = vadd.f32 %v402, %v546
  %v548 = vpop.f32.mrf.mxu0
  %549 = vmatprep.mubr.f32.mxu0 %v83
  %550 = vmatmul.mubr.f32.gmra.mxu0 %v82
  %v551 = vpop.f32.mrf.mxu0
  %v552 = vadd.f32 %v407, %v551
  %v553 = vpop.f32.mrf.mxu0
  %554 = vmatprep.mubr.f32.mxu0 %v92
  %555 = vmatmul.mubr.f32.gmra.mxu0 %v91
  %v556 = vpop.f32.mrf.mxu0
  %v557 = vadd.f32 %v412, %v556
  %v558 = vpop.f32.mrf.mxu0
  %559 = vmatprep.mubr.f32.mxu0 %v101
  %560 = vmatmul.mubr.f32.gmra.mxu0 %v100
  %v561 = vpop.f32.mrf.mxu0
  %v562 = vadd.f32 %v417, %v561
  %v563 = vpop.f32.mrf.mxu0
  %564 = vmatprep.mubr.f32.mxu0 %v110
  %565 = vmatmul.mubr.f32.gmra.mxu0 %v109
  %v566 = vpop.f32.mrf.mxu0
  %v567 = vadd.f32 %v422, %v566
  %v568 = vpop.f32.mrf.mxu0
  %569 = vmatprep.mubr.f32.mxu0 %v119
  %570 = vmatmul.mubr.f32.gmra.mxu0 %v118
  %v571 = vpop.f32.mrf.mxu0
  %v572 = vadd.f32 %v427, %v571
  %v573 = vpop.f32.mrf.mxu0
  %574 = vmatprep.mubr.f32.mxu0 %v128
  %575 = vmatmul.mubr.f32.gmra.mxu0 %v127
  %v576 = vpop.f32.mrf.mxu0
  %v577 = vadd.f32 %v432, %v576
  %v578 = vpop.f32.mrf.mxu0
  %579 = vmatprep.mubr.f32.mxu0 %v137
  %580 = vmatmul.mubr.f32.gmra.mxu0 %v136
  %v581 = vpop.f32.mrf.mxu0
  %v582 = vadd.f32 %v437, %v581
  %v583 = vpop.f32.mrf.mxu0
  %584 = vmatprep.mubr.f32.mxu0 %v146
  %585 = vmatmul.mubr.f32.gmra.mxu0 %v145
  %v586 = vpop.f32.mrf.mxu0
  %v587 = vadd.f32 %v442, %v586
  %v588 = vpop.f32.mrf.mxu0
  %589 = vmatprep.mubr.f32.mxu0 %v155
  %590 = vmatmul.mubr.f32.gmra.mxu0 %v154
  %v591 = vpop.f32.mrf.mxu0
  %v592 = vadd.f32 %v447, %v591
  %v593 = vpop.f32.mrf.mxu0
  %594 = vdwg.mxu0
  %595 = vmatprep.subr.mxu0 0.0
  %596 = vmatpush1.msra.mxu0 %v240
  %597 = vmatprep.subr.mxu0 0.0
  %598 = vmatpush1.msra.mxu0 %v239
  %599 = vmatprep.subr.mxu0 0.0
  %600 = vmatpush1.msra.mxu0 %v238
  %601 = vmatprep.subr.mxu0 0.0
  %602 = vmatpush1.msra.mxu0 %v237
  %603 = vmatprep.subr.mxu0 0.0
  %604 = vmatpush1.msra.mxu0 %v236
  %605 = vmatprep.subr.mxu0 0.0
  %606 = vmatpush1.msra.mxu0 %v235
  %607 = vmatprep.subr.mxu0 0.0
  %608 = vmatpush1.msra.mxu0 %v234
  %609 = vmatprep.subr.mxu0 0.0
  %610 = vmatpush1.msra.mxu0 %v233
  %611 = vmatprep.subr.mxu0 0.0
  %612 = vmatpush1.msra.mxu0 %v232
  %613 = vmatprep.subr.mxu0 0.0
  %614 = vmatpush1.msra.mxu0 %v231
  %615 = vmatprep.subr.mxu0 0.0
  %616 = vmatpush1.msra.mxu0 %v230
  %617 = vmatprep.subr.mxu0 0.0
  %618 = vmatpush1.msra.mxu0 %v229
  %619 = vmatprep.subr.mxu0 0.0
  %620 = vmatpush1.msra.mxu0 %v228
  %621 = vmatprep.subr.mxu0 0.0
  %622 = vmatpush1.msra.mxu0 %v227
  %623 = vmatprep.subr.mxu0 0.0
  %624 = vmatpush1.msra.mxu0 %v226
  %625 = vmatprep.subr.mxu0 0.0
  %626 = vmatpush1.msra.mxu0 %v225
  %627 = vmatprep.subr.mxu0 0.0
  %628 = vmatpush2.msra.mxu0 %v256
  %629 = vmatprep.subr.mxu0 0.0
  %630 = vmatpush2.msra.mxu0 %v255
  %631 = vmatprep.subr.mxu0 0.0
  %632 = vmatpush2.msra.mxu0 %v254
  %633 = vmatprep.subr.mxu0 0.0
  %634 = vmatpush2.msra.mxu0 %v253
  %635 = vmatprep.subr.mxu0 0.0
  %636 = vmatpush2.msra.mxu0 %v252
  %637 = vmatprep.subr.mxu0 0.0
  %638 = vmatpush2.msra.mxu0 %v251
  %639 = vmatprep.subr.mxu0 0.0
  %640 = vmatpush2.msra.mxu0 %v250
  %641 = vmatprep.subr.mxu0 0.0
  %642 = vmatpush2.msra.mxu0 %v249
  %643 = vmatprep.subr.mxu0 0.0
  %644 = vmatpush2.msra.mxu0 %v248
  %645 = vmatprep.subr.mxu0 0.0
  %646 = vmatpush2.msra.mxu0 %v247
  %647 = vmatprep.subr.mxu0 0.0
  %648 = vmatpush2.msra.mxu0 %v246
  %649 = vmatprep.subr.mxu0 0.0
  %650 = vmatpush2.msra.mxu0 %v245
  %651 = vmatprep.subr.mxu0 0.0
  %652 = vmatpush2.msra.mxu0 %v244
  %653 = vmatprep.subr.mxu0 0.0
  %654 = vmatpush2.msra.mxu0 %v243
  %655 = vmatprep.subr.mxu0 0.0
  %656 = vmatpush2.msra.mxu0 %v242
  %657 = vmatprep.subr.mxu0 0.0
  %658 = vmatpush2.msra.mxu0 %v241
  %659 = vmatprep.mubr.f32.mxu0 %v22
  %660 = vmatmul.mubr.f32.gmra.mxu0 %v21
  %v661 = vpop.f32.mrf.mxu0
  %v662 = vadd.f32 %v517, %v661
  %v663 = vpop.f32.mrf.mxu0
  %664 = vmatprep.mubr.f32.mxu0 %v31
  %665 = vmatmul.mubr.f32.gmra.mxu0 %v30
  %v666 = vpop.f32.mrf.mxu0
  %v667 = vadd.f32 %v522, %v666
  %v668 = vpop.f32.mrf.mxu0
  %669 = vmatprep.mubr.f32.mxu0 %v40
  %670 = vmatmul.mubr.f32.gmra.mxu0 %v39
  %v671 = vpop.f32.mrf.mxu0
  %v672 = vadd.f32 %v527, %v671
  %v673 = vpop.f32.mrf.mxu0
  %674 = vmatprep.mubr.f32.mxu0 %v49
  %675 = vmatmul.mubr.f32.gmra.mxu0 %v48
  %v676 = vpop.f32.mrf.mxu0
  %v677 = vadd.f32 %v532, %v676
  %v678 = vpop.f32.mrf.mxu0
  %679 = vmatprep.mubr.f32.mxu0 %v58
  %680 = vmatmul.mubr.f32.gmra.mxu0 %v57
  %v681 = vpop.f32.mrf.mxu0
  %v682 = vadd.f32 %v537, %v681
  %v683 = vpop.f32.mrf.mxu0
  %684 = vmatprep.mubr.f32.mxu0 %v67
  %685 = vmatmul.mubr.f32.gmra.mxu0 %v66
  %v686 = vpop.f32.mrf.mxu0
  %v687 = vadd.f32 %v542, %v686
  %v688 = vpop.f32.mrf.mxu0
  %689 = vmatprep.mubr.f32.mxu0 %v76
  %690 = vmatmul.mubr.f32.gmra.mxu0 %v75
  %v691 = vpop.f32.mrf.mxu0
  %v692 = vadd.f32 %v547, %v691
  %v693 = vpop.f32.mrf.mxu0
  %694 = vmatprep.mubr.f32.mxu0 %v85
  %695 = vmatmul.mubr.f32.gmra.mxu0 %v84
  %v696 = vpop.f32.mrf.mxu0
  %v697 = vadd.f32 %v552, %v696
  %v698 = vpop.f32.mrf.mxu0
  %699 = vmatprep.mubr.f32.mxu0 %v94
  %700 = vmatmul.mubr.f32.gmra.mxu0 %v93
  %v701 = vpop.f32.mrf.mxu0
  %v702 = vadd.f32 %v557, %v701
  %v703 = vpop.f32.mrf.mxu0
  %704 = vmatprep.mubr.f32.mxu0 %v103
  %705 = vmatmul.mubr.f32.gmra.mxu0 %v102
  %v706 = vpop.f32.mrf.mxu0
  %v707 = vadd.f32 %v562, %v706
  %v708 = vpop.f32.mrf.mxu0
  %709 = vmatprep.mubr.f32.mxu0 %v112
  %710 = vmatmul.mubr.f32.gmra.mxu0 %v111
  %v711 = vpop.f32.mrf.mxu0
  %v712 = vadd.f32 %v567, %v711
  %v713 = vpop.f32.mrf.mxu0
  %714 = vmatprep.mubr.f32.mxu0 %v121
  %715 = vmatmul.mubr.f32.gmra.mxu0 %v120
  %v716 = vpop.f32.mrf.mxu0
  %v717 = vadd.f32 %v572, %v716
  %v718 = vpop.f32.mrf.mxu0
  %719 = vmatprep.mubr.f32.mxu0 %v130
  %720 = vmatmul.mubr.f32.gmra.mxu0 %v129
  %v721 = vpop.f32.mrf.mxu0
  %v722 = vadd.f32 %v577, %v721
  %v723 = vpop.f32.mrf.mxu0
  %724 = vmatprep.mubr.f32.mxu0 %v139
  %725 = vmatmul.mubr.f32.gmra.mxu0 %v138
  %v726 = vpop.f32.mrf.mxu0
  %v727 = vadd.f32 %v582, %v726
  %v728 = vpop.f32.mrf.mxu0
  %729 = vmatprep.mubr.f32.mxu0 %v148
  %730 = vmatmul.mubr.f32.gmra.mxu0 %v147
  %v731 = vpop.f32.mrf.mxu0
  %v732 = vadd.f32 %v587, %v731
  %v733 = vpop.f32.mrf.mxu0
  %734 = vmatprep.mubr.f32.mxu0 %v157
  %735 = vmatmul.mubr.f32.gmra.mxu0 %v156
  %v736 = vpop.f32.mrf.mxu0
  %v737 = vadd.f32 %v592, %v736
  %v738 = vpop.f32.mrf.mxu0
  %739 = vdwg.mxu0
  %740 = vmatprep.subr.mxu0 0.0
  %741 = vmatpush1.msra.mxu0 %v272
  %742 = vmatprep.subr.mxu0 0.0
  %743 = vmatpush1.msra.mxu0 %v271
  %744 = vmatprep.subr.mxu0 0.0
  %745 = vmatpush1.msra.mxu0 %v270
  %746 = vmatprep.subr.mxu0 0.0
  %747 = vmatpush1.msra.mxu0 %v269
  %748 = vmatprep.subr.mxu0 0.0
  %749 = vmatpush1.msra.mxu0 %v268
  %750 = vmatprep.subr.mxu0 0.0
  %751 = vmatpush1.msra.mxu0 %v267
  %752 = vmatprep.subr.mxu0 0.0
  %753 = vmatpush1.msra.mxu0 %v266
  %754 = vmatprep.subr.mxu0 0.0
  %755 = vmatpush1.msra.mxu0 %v265
  %756 = vmatprep.subr.mxu0 0.0
  %757 = vmatpush1.msra.mxu0 %v264
  %758 = vmatprep.subr.mxu0 0.0
  %759 = vmatpush1.msra.mxu0 %v263
  %760 = vmatprep.subr.mxu0 0.0
  %761 = vmatpush1.msra.mxu0 %v262
  %762 = vmatprep.subr.mxu0 0.0
  %763 = vmatpush1.msra.mxu0 %v261
  %764 = vmatprep.subr.mxu0 0.0
  %765 = vmatpush1.msra.mxu0 %v260
  %766 = vmatprep.subr.mxu0 0.0
  %767 = vmatpush1.msra.mxu0 %v259
  %768 = vmatprep.subr.mxu0 0.0
  %769 = vmatpush1.msra.mxu0 %v258
  %770 = vmatprep.subr.mxu0 0.0
  %771 = vmatpush1.msra.mxu0 %v257
  %772 = vmatprep.subr.mxu0 0.0
  %773 = vmatpush2.msra.mxu0 %v288
  %774 = vmatprep.subr.mxu0 0.0
  %775 = vmatpush2.msra.mxu0 %v287
  %776 = vmatprep.subr.mxu0 0.0
  %777 = vmatpush2.msra.mxu0 %v286
  %778 = vmatprep.subr.mxu0 0.0
  %779 = vmatpush2.msra.mxu0 %v285
  %780 = vmatprep.subr.mxu0 0.0
  %781 = vmatpush2.msra.mxu0 %v284
  %782 = vmatprep.subr.mxu0 0.0
  %783 = vmatpush2.msra.mxu0 %v283
  %784 = vmatprep.subr.mxu0 0.0
  %785 = vmatpush2.msra.mxu0 %v282
  %786 = vmatprep.subr.mxu0 0.0
  %787 = vmatpush2.msra.mxu0 %v281
  %788 = vmatprep.subr.mxu0 0.0
  %789 = vmatpush2.msra.mxu0 %v280
  %790 = vmatprep.subr.mxu0 0.0
  %791 = vmatpush2.msra.mxu0 %v279
  %792 = vmatprep.subr.mxu0 0.0
  %793 = vmatpush2.msra.mxu0 %v278
  %794 = vmatprep.subr.mxu0 0.0
  %795 = vmatpush2.msra.mxu0 %v277
  %796 = vmatprep.subr.mxu0 0.0
  %797 = vmatpush2.msra.mxu0 %v276
  %798 = vmatprep.subr.mxu0 0.0
  %799 = vmatpush2.msra.mxu0 %v275
  %800 = vmatprep.subr.mxu0 0.0
  %801 = vmatpush2.msra.mxu0 %v274
  %802 = vmatprep.subr.mxu0 0.0
  %803 = vmatpush2.msra.mxu0 %v273
  %804 = vmatprep.mubr.f32.mxu0 %v24
  %805 = vmatmul.mubr.f32.gmra.mxu0 %v23
  %v806 = vpop.f32.mrf.mxu0
  %v807 = vadd.f32 %v662, %v806
  %v808 = vpop.f32.mrf.mxu0
  %809 = vmatprep.mubr.f32.mxu0 %v33
  %810 = vmatmul.mubr.f32.gmra.mxu0 %v32
  %v811 = vpop.f32.mrf.mxu0
  %v812 = vadd.f32 %v667, %v811
  %v813 = vpop.f32.mrf.mxu0
  %814 = vmatprep.mubr.f32.mxu0 %v42
  %815 = vmatmul.mubr.f32.gmra.mxu0 %v41
  %v816 = vpop.f32.mrf.mxu0
  %v817 = vadd.f32 %v672, %v816
  %v818 = vpop.f32.mrf.mxu0
  %819 = vmatprep.mubr.f32.mxu0 %v51
  %820 = vmatmul.mubr.f32.gmra.mxu0 %v50
  %v821 = vpop.f32.mrf.mxu0
  %v822 = vadd.f32 %v677, %v821
  %v823 = vpop.f32.mrf.mxu0
  %824 = vmatprep.mubr.f32.mxu0 %v60
  %825 = vmatmul.mubr.f32.gmra.mxu0 %v59
  %v826 = vpop.f32.mrf.mxu0
  %v827 = vadd.f32 %v682, %v826
  %v828 = vpop.f32.mrf.mxu0
  %829 = vmatprep.mubr.f32.mxu0 %v69
  %830 = vmatmul.mubr.f32.gmra.mxu0 %v68
  %v831 = vpop.f32.mrf.mxu0
  %v832 = vadd.f32 %v687, %v831
  %v833 = vpop.f32.mrf.mxu0
  %834 = vmatprep.mubr.f32.mxu0 %v78
  %835 = vmatmul.mubr.f32.gmra.mxu0 %v77
  %v836 = vpop.f32.mrf.mxu0
  %v837 = vadd.f32 %v692, %v836
  %v838 = vpop.f32.mrf.mxu0
  %839 = vmatprep.mubr.f32.mxu0 %v87
  %840 = vmatmul.mubr.f32.gmra.mxu0 %v86
  %v841 = vpop.f32.mrf.mxu0
  %v842 = vadd.f32 %v697, %v841
  %v843 = vpop.f32.mrf.mxu0
  %844 = vmatprep.mubr.f32.mxu0 %v96
  %845 = vmatmul.mubr.f32.gmra.mxu0 %v95
  %v846 = vpop.f32.mrf.mxu0
  %v847 = vadd.f32 %v702, %v846
  %v848 = vpop.f32.mrf.mxu0
  %849 = vmatprep.mubr.f32.mxu0 %v105
  %850 = vmatmul.mubr.f32.gmra.mxu0 %v104
  %v851 = vpop.f32.mrf.mxu0
  %v852 = vadd.f32 %v707, %v851
  %v853 = vpop.f32.mrf.mxu0
  %854 = vmatprep.mubr.f32.mxu0 %v114
  %855 = vmatmul.mubr.f32.gmra.mxu0 %v113
  %v856 = vpop.f32.mrf.mxu0
  %v857 = vadd.f32 %v712, %v856
  %v858 = vpop.f32.mrf.mxu0
  %859 = vmatprep.mubr.f32.mxu0 %v123
  %860 = vmatmul.mubr.f32.gmra.mxu0 %v122
  %v861 = vpop.f32.mrf.mxu0
  %v862 = vadd.f32 %v717, %v861
  %v863 = vpop.f32.mrf.mxu0
  %864 = vmatprep.mubr.f32.mxu0 %v132
  %865 = vmatmul.mubr.f32.gmra.mxu0 %v131
  %v866 = vpop.f32.mrf.mxu0
  %v867 = vadd.f32 %v722, %v866
  %v868 = vpop.f32.mrf.mxu0
  %869 = vmatprep.mubr.f32.mxu0 %v141
  %870 = vmatmul.mubr.f32.gmra.mxu0 %v140
  %v871 = vpop.f32.mrf.mxu0
  %v872 = vadd.f32 %v727, %v871
  %v873 = vpop.f32.mrf.mxu0
  %874 = vmatprep.mubr.f32.mxu0 %v150
  %875 = vmatmul.mubr.f32.gmra.mxu0 %v149
  %v876 = vpop.f32.mrf.mxu0
  %v877 = vadd.f32 %v732, %v876
  %v878 = vpop.f32.mrf.mxu0
  %879 = vmatprep.mubr.f32.mxu0 %v159
  %880 = vmatmul.mubr.f32.gmra.mxu0 %v158
  %v881 = vpop.f32.mrf.mxu0
  %v882 = vadd.f32 %v737, %v881
  %v883 = vpop.f32.mrf.mxu0
  %884 = vdwg.mxu0
  %885 = vmatprep.subr.mxu0 0.0
  %886 = vmatpush1.msra.mxu0 %v304
  %887 = vmatprep.subr.mxu0 0.0
  %888 = vmatpush1.msra.mxu0 %v303
  %889 = vmatprep.subr.mxu0 0.0
  %890 = vmatpush1.msra.mxu0 %v302
  %891 = vmatprep.subr.mxu0 0.0
  %892 = vmatpush1.msra.mxu0 %v301
  %893 = vmatprep.subr.mxu0 0.0
  %894 = vmatpush1.msra.mxu0 %v300
  %895 = vmatprep.subr.mxu0 0.0
  %896 = vmatpush1.msra.mxu0 %v299
  %897 = vmatprep.subr.mxu0 0.0
  %898 = vmatpush1.msra.mxu0 %v298
  %899 = vmatprep.subr.mxu0 0.0
  %900 = vmatpush1.msra.mxu0 %v297
  %901 = vmatprep.subr.mxu0 0.0
  %902 = vmatpush1.msra.mxu0 %v296
  %903 = vmatprep.subr.mxu0 0.0
  %904 = vmatpush1.msra.mxu0 %v295
  %905 = vmatprep.subr.mxu0 0.0
  %906 = vmatpush1.msra.mxu0 %v294
  %907 = vmatprep.subr.mxu0 0.0
  %908 = vmatpush1.msra.mxu0 %v293
  %909 = vmatprep.subr.mxu0 0.0
  %910 = vmatpush1.msra.mxu0 %v292
  %911 = vmatprep.subr.mxu0 0.0
  %912 = vmatpush1.msra.mxu0 %v291
  %913 = vmatprep.subr.mxu0 0.0
  %914 = vmatpush1.msra.mxu0 %v290
  %915 = vmatprep.subr.mxu0 0.0
  %916 = vmatpush1.msra.mxu0 %v289
  %917 = vmatprep.subr.mxu0 0.0
  %918 = vmatpush2.msra.mxu0 0.0
  %919 = vmatprep.subr.mxu0 0.0
  %920 = vmatpush2.msra.mxu0 0.0
  %921 = vmatprep.subr.mxu0 0.0
  %922 = vmatpush2.msra.mxu0 0.0
  %923 = vmatprep.subr.mxu0 0.0
  %924 = vmatpush2.msra.mxu0 0.0
  %925 = vmatprep.subr.mxu0 0.0
  %926 = vmatpush2.msra.mxu0 0.0
  %927 = vmatprep.subr.mxu0 0.0
  %928 = vmatpush2.msra.mxu0 0.0
  %929 = vmatprep.subr.mxu0 0.0
  %930 = vmatpush2.msra.mxu0 0.0
  %931 = vmatprep.subr.mxu0 0.0
  %932 = vmatpush2.msra.mxu0 0.0
  %933 = vmatprep.subr.mxu0 0.0
  %934 = vmatpush2.msra.mxu0 0.0
  %935 = vmatprep.subr.mxu0 0.0
  %936 = vmatpush2.msra.mxu0 0.0
  %937 = vmatprep.subr.mxu0 0.0
  %938 = vmatpush2.msra.mxu0 0.0
  %939 = vmatprep.subr.mxu0 0.0
  %940 = vmatpush2.msra.mxu0 0.0
  %941 = vmatprep.subr.mxu0 0.0
  %942 = vmatpush2.msra.mxu0 0.0
  %943 = vmatprep.subr.mxu0 0.0
  %944 = vmatpush2.msra.mxu0 0.0
  %945 = vmatprep.subr.mxu0 0.0
  %946 = vmatpush2.msra.mxu0 0.0
  %947 = vmatprep.subr.mxu0 0.0
  %948 = vmatpush2.msra.mxu0 0.0
  %949 = vmatprep.mubr.f32.mxu0 0.0
  %950 = vmatmul.mubr.f32.gmra.mxu0 %v25
  %v951 = vpop.f32.mrf.mxu0
  %v952 = vadd.f32 %v807, %v951
  %v953 = vpop.f32.mrf.mxu0
  %954 = vmatprep.mubr.f32.mxu0 0.0
  %955 = vmatmul.mubr.f32.gmra.mxu0 %v34
  %v956 = vpop.f32.mrf.mxu0
  %v957 = vadd.f32 %v812, %v956
  %v958 = vpop.f32.mrf.mxu0
  %959 = vmatprep.mubr.f32.mxu0 0.0
  %960 = vmatmul.mubr.f32.gmra.mxu0 %v43
  %v961 = vpop.f32.mrf.mxu0
  %v962 = vadd.f32 %v817, %v961
  %v963 = vpop.f32.mrf.mxu0
  %964 = vmatprep.mubr.f32.mxu0 0.0
  %965 = vmatmul.mubr.f32.gmra.mxu0 %v52
  %v966 = vpop.f32.mrf.mxu0
  %v967 = vadd.f32 %v822, %v966
  %v968 = vpop.f32.mrf.mxu0
  %969 = vmatprep.mubr.f32.mxu0 0.0
  %970 = vmatmul.mubr.f32.gmra.mxu0 %v61
  %v971 = vpop.f32.mrf.mxu0
  %v972 = vadd.f32 %v827, %v971
  %v973 = vpop.f32.mrf.mxu0
  %974 = vmatprep.mubr.f32.mxu0 0.0
  %975 = vmatmul.mubr.f32.gmra.mxu0 %v70
  %v976 = vpop.f32.mrf.mxu0
  %v977 = vadd.f32 %v832, %v976
  %v978 = vpop.f32.mrf.mxu0
  %979 = vmatprep.mubr.f32.mxu0 0.0
  %980 = vmatmul.mubr.f32.gmra.mxu0 %v79
  %v981 = vpop.f32.mrf.mxu0
  %v982 = vadd.f32 %v837, %v981
  %v983 = vpop.f32.mrf.mxu0
  %984 = vmatprep.mubr.f32.mxu0 0.0
  %985 = vmatmul.mubr.f32.gmra.mxu0 %v88
  %v986 = vpop.f32.mrf.mxu0
  %v987 = vadd.f32 %v842, %v986
  %v988 = vpop.f32.mrf.mxu0
  %989 = vmatprep.mubr.f32.mxu0 0.0
  %990 = vmatmul.mubr.f32.gmra.mxu0 %v97
  %v991 = vpop.f32.mrf.mxu0
  %v992 = vadd.f32 %v847, %v991
  %v993 = vpop.f32.mrf.mxu0
  %994 = vmatprep.mubr.f32.mxu0 0.0
  %995 = vmatmul.mubr.f32.gmra.mxu0 %v106
  %v996 = vpop.f32.mrf.mxu0
  %v997 = vadd.f32 %v852, %v996
  %v998 = vpop.f32.mrf.mxu0
  %999 = vmatprep.mubr.f32.mxu0 0.0
  %1000 = vmatmul.mubr.f32.gmra.mxu0 %v115
  %v1001 = vpop.f32.mrf.mxu0
  %v1002 = vadd.f32 %v857, %v1001
  %v1003 = vpop.f32.mrf.mxu0
  %1004 = vmatprep.mubr.f32.mxu0 0.0
  %1005 = vmatmul.mubr.f32.gmra.mxu0 %v124
  %v1006 = vpop.f32.mrf.mxu0
  %v1007 = vadd.f32 %v862, %v1006
  %v1008 = vpop.f32.mrf.mxu0
  %1009 = vmatprep.mubr.f32.mxu0 0.0
  %1010 = vmatmul.mubr.f32.gmra.mxu0 %v133
  %v1011 = vpop.f32.mrf.mxu0
  %v1012 = vadd.f32 %v867, %v1011
  %v1013 = vpop.f32.mrf.mxu0
  %1014 = vmatprep.mubr.f32.mxu0 0.0
  %1015 = vmatmul.mubr.f32.gmra.mxu0 %v142
  %v1016 = vpop.f32.mrf.mxu0
  %v1017 = vadd.f32 %v872, %v1016
  %v1018 = vpop.f32.mrf.mxu0
  %1019 = vmatprep.mubr.f32.mxu0 0.0
  %1020 = vmatmul.mubr.f32.gmra.mxu0 %v151
  %v1021 = vpop.f32.mrf.mxu0
  %v1022 = vadd.f32 %v877, %v1021
  %v1023 = vpop.f32.mrf.mxu0
  %1024 = vmatprep.mubr.f32.mxu0 0.0
  %1025 = vmatmul.mubr.f32.gmra.mxu0 %v160
  %v1026 = vpop.f32.mrf.mxu0
  %v1027 = vadd.f32 %v882, %v1026
  %v1028 = vpop.f32.mrf.mxu0
  %1029 = vdwg.mxu0
  %v1030 = vld [vmem:[%s2] sm:$0x1]
  %v1032 = vlaneseq
  %v1033 = vshrl.u32 %v1032, 7
  %v1034 = vsub.s32 0, %v1033
  %v1035 = vrot.slane %v1030, %v1034
  %v1037 = vmul.f32 %v952, %v1035
  %v1038 = vmul.f32 %v957, %v1035
  %v1039 = vmul.f32 %v962, %v1035
  %v1040 = vmul.f32 %v967, %v1035
  %v1041 = vmul.f32 %v972, %v1035
  %v1042 = vmul.f32 %v977, %v1035
  %v1043 = vmul.f32 %v982, %v1035
  %v1044 = vmul.f32 %v987, %v1035
  %v1045 = vmul.f32 %v992, %v1035
  %v1046 = vmul.f32 %v997, %v1035
  %v1047 = vmul.f32 %v1002, %v1035
  %v1048 = vmul.f32 %v1007, %v1035
  %v1049 = vmul.f32 %v1012, %v1035
  %v1050 = vmul.f32 %v1017, %v1035
  %v1051 = vmul.f32 %v1022, %v1035
  %v1052 = vmul.f32 %v1027, %v1035
  %v1053 = vld [vmem:[%s3] sm:$0x1]
  %v1055 = vlaneseq
  %v1056 = vshrl.u32 %v1055, 7
  %v1057 = vsub.s32 0, %v1056
  %v1058 = vrot.slane %v1053, %v1057
  %v1060 = vadd.f32 %v1037, %v1058
  %v1061 = vadd.f32 %v1038, %v1058
  %v1062 = vadd.f32 %v1039, %v1058
  %v1063 = vadd.f32 %v1040, %v1058
  %v1064 = vadd.f32 %v1041, %v1058
  %v1065 = vadd.f32 %v1042, %v1058
  %v1066 = vadd.f32 %v1043, %v1058
  %v1067 = vadd.f32 %v1044, %v1058
  %v1068 = vadd.f32 %v1045, %v1058
  %v1069 = vadd.f32 %v1046, %v1058
  %v1070 = vadd.f32 %v1047, %v1058
  %v1071 = vadd.f32 %v1048, %v1058
  %v1072 = vadd.f32 %v1049, %v1058
  %v1073 = vadd.f32 %v1050, %v1058
  %v1074 = vadd.f32 %v1051, %v1058
  %v1075 = vadd.f32 %v1052, %v1058
  %v1076 = vmax.f32 %v1060, 0.0
  %v1077 = vmax.f32 %v1061, 0.0
  %v1078 = vmax.f32 %v1062, 0.0
  %v1079 = vmax.f32 %v1063, 0.0
  %v1080 = vmax.f32 %v1064, 0.0
  %v1081 = vmax.f32 %v1065, 0.0
  %v1082 = vmax.f32 %v1066, 0.0
  %v1083 = vmax.f32 %v1067, 0.0
  %v1084 = vmax.f32 %v1068, 0.0
  %v1085 = vmax.f32 %v1069, 0.0
  %v1086 = vmax.f32 %v1070, 0.0
  %v1087 = vmax.f32 %v1071, 0.0
  %v1088 = vmax.f32 %v1072, 0.0
  %v1089 = vmax.f32 %v1073, 0.0
  %v1090 = vmax.f32 %v1074, 0.0
  %v1091 = vmax.f32 %v1075, 0.0
  %1092 = vst [vmem:[%s4] sm:$0xff] %v1076
  %1093 = vst [vmem:[%s4 + $0x8] sm:$0xff] %v1077
  %1094 = vst [vmem:[%s4 + $0x10] sm:$0xff] %v1078
  %1095 = vst [vmem:[%s4 + $0x18] sm:$0xff] %v1079
  %1096 = vst [vmem:[%s4 + $0x20] sm:$0xff] %v1080
  %1097 = vst [vmem:[%s4 + $0x28] sm:$0xff] %v1081
  %1098 = vst [vmem:[%s4 + $0x30] sm:$0xff] %v1082
  %1099 = vst [vmem:[%s4 + $0x38] sm:$0xff] %v1083
  %1100 = vst [vmem:[%s4 + $0x40] sm:$0xff] %v1084
  %1101 = vst [vmem:[%s4 + $0x48] sm:$0xff] %v1085
  %1102 = vst [vmem:[%s4 + $0x50] sm:$0xff] %v1086
  %1103 = vst [vmem:[%s4 + $0x58] sm:$0xff] %v1087
  %1104 = vst [vmem:[%s4 + $0x60] sm:$0xff] %v1088
  %1105 = vst [vmem:[%s4 + $0x68] sm:$0xff] %v1089
  %1106 = vst [vmem:[%s4 + $0x70] sm:$0xff] %v1090
  %1107 = vst [vmem:[%s4 + $0x78] sm:$0xff] %v1091
  // Predicated region
  $region18: #{resnet_block_forward.2} parent=0 // pred_check
    _
  $region19: #{resnet_block_forward.2} parent=0 // pred_check_branch
    %1109 = sbr.rel (0) target = $region21
  $region20: #{resnet_block_forward.2} parent=0 // pred_region
    _
  $region21: #{resnet_block_forward.2} parent=0 // pred_fallthru
    _
  // Predicated region
  $region22: #{resnet_block_forward.2} parent=0 // pred_check
    _
  $region23: #{resnet_block_forward.2} parent=0 // pred_check_branch
    %1111 = sbr.rel (0) target = $region25
  $region24: #{resnet_block_forward.2} parent=0 // pred_region
    _
  $region25: #{resnet_block_forward.2} parent=0 // pred_fallthru
    _

// kernel: resnet_block_forward.3
$region0: #{resnet_block_forward.3}
  #allocation0 [shape = 'u32[]', space=smem, size = 0x4, offset = 0x4, fixed_abs, tag = 'smem constant byte address 0x4 - core index']
  #allocation1 [shape = 'u32[144,128]{1,0:T(1,128)}', space=vmem, size = 0x12000, scoped, tag = 'internal scratch']
  %s0 = inlined_call_operand.vmem [shape: f32[128,1152], index: 0, kind: input, shape index: {}]
  %s1 = inlined_call_operand.vmem [shape: f32[1152,128], index: 1, kind: input, shape index: {}]
  %s2 = inlined_call_operand.vmem [shape: f32[1,128], index: 2, kind: input, shape index: {}]
  %s3 = inlined_call_operand.vmem [shape: f32[1,128], index: 3, kind: input, shape index: {}]
  %s4 = inlined_call_operand.vmem [shape: f32[128,128], index: 4, kind: input, shape index: {}]
  %s5 = inlined_call_operand.vmem [shape: f32[128,128], index: 5, kind: input, shape index: {}]
  %s6 = inlined_call_operand.vmem [shape: f32[1,128], index: 6, kind: input, shape index: {}]
  %s7 = inlined_call_operand.vmem [shape: f32[1,128], index: 7, kind: input, shape index: {}]
  %s8 = inlined_call_operand.vmem [shape: f32[128,128], index: 8, kind: output, shape index: {}]
  %s9 = sld [smem:[#allocation0]]
  $region42: #{resnet_block_forward.3} parent=0
    _
  %s11 = ssub.s32 1, %s9
  %s12 = scalar_select 0, %s11, %s9
  // Predicated region
  $region2: #{resnet_block_forward.3} parent=0 // pred_check
    _
  $region3: #{resnet_block_forward.3} parent=0 // pred_check_branch
    %14 = sbr.rel (0) target = $region5
  $region4: #{resnet_block_forward.3} parent=0 // pred_region
    _
  $region5: #{resnet_block_forward.3} parent=0 // pred_fallthru
    _
  // Predicated region
  $region6: #{resnet_block_forward.3} parent=0 // pred_check
    _
  $region7: #{resnet_block_forward.3} parent=0 // pred_check_branch
    %16 = sbr.rel (0) target = $region9
  $region8: #{resnet_block_forward.3} parent=0 // pred_region
    _
  $region9: #{resnet_block_forward.3} parent=0 // pred_fallthru
    _
  // Predicated region
  $region10: #{resnet_block_forward.3} parent=0 // pred_check
    _
  $region11: #{resnet_block_forward.3} parent=0 // pred_check_branch
    %18 = sbr.rel (0) target = $region13
  $region12: #{resnet_block_forward.3} parent=0 // pred_region
    _
  $region13: #{resnet_block_forward.3} parent=0 // pred_fallthru
    _
  // Predicated region
  $region14: #{resnet_block_forward.3} parent=0 // pred_check
    _
  $region15: #{resnet_block_forward.3} parent=0 // pred_check_branch
    %20 = sbr.rel (0) target = $region17
  $region16: #{resnet_block_forward.3} parent=0 // pred_region
    _
  $region17: #{resnet_block_forward.3} parent=0 // pred_fallthru
    _
  // Predicated region
  $region18: #{resnet_block_forward.3} parent=0 // pred_check
    _
  $region19: #{resnet_block_forward.3} parent=0 // pred_check_branch
    %22 = sbr.rel (0) target = $region21
  $region20: #{resnet_block_forward.3} parent=0 // pred_region
    _
  $region21: #{resnet_block_forward.3} parent=0 // pred_fallthru
    _
  // Predicated region
  $region22: #{resnet_block_forward.3} parent=0 // pred_check
    _
  $region23: #{resnet_block_forward.3} parent=0 // pred_check_branch
    %24 = sbr.rel (0) target = $region25
  $region24: #{resnet_block_forward.3} parent=0 // pred_region
    _
  $region25: #{resnet_block_forward.3} parent=0 // pred_fallthru
    _
  // Predicated region
  $region26: #{resnet_block_forward.3} parent=0 // pred_check
    _
  $region27: #{resnet_block_forward.3} parent=0 // pred_check_branch
    %26 = sbr.rel (0) target = $region29
  $region28: #{resnet_block_forward.3} parent=0 // pred_region
    _
  $region29: #{resnet_block_forward.3} parent=0 // pred_fallthru
    _
  // Predicated region
  $region30: #{resnet_block_forward.3} parent=0 // pred_check
    _
  $region31: #{resnet_block_forward.3} parent=0 // pred_check_branch
    %28 = sbr.rel (0) target = $region33
  $region32: #{resnet_block_forward.3} parent=0 // pred_region
    _
  $region33: #{resnet_block_forward.3} parent=0 // pred_fallthru
    _
  %v29 = vld [vmem:[%s0] sm:$0xff]
  %v30 = vld [vmem:[%s0 + $0x8] sm:$0xff]
  %v31 = vld [vmem:[%s0 + $0x10] sm:$0xff]
  %v32 = vld [vmem:[%s0 + $0x18] sm:$0xff]
  %v33 = vld [vmem:[%s0 + $0x20] sm:$0xff]
  %v34 = vld [vmem:[%s0 + $0x28] sm:$0xff]
  %v35 = vld [vmem:[%s0 + $0x30] sm:$0xff]
  %v36 = vld [vmem:[%s0 + $0x38] sm:$0xff]
  %v37 = vld [vmem:[%s0 + $0x40] sm:$0xff]
  %v38 = vld [vmem:[%s0 + $0x48] sm:$0xff]
  %v39 = vld [vmem:[%s0 + $0x50] sm:$0xff]
  %v40 = vld [vmem:[%s0 + $0x58] sm:$0xff]
  %v41 = vld [vmem:[%s0 + $0x60] sm:$0xff]
  %v42 = vld [vmem:[%s0 + $0x68] sm:$0xff]
  %v43 = vld [vmem:[%s0 + $0x70] sm:$0xff]
  %v44 = vld [vmem:[%s0 + $0x78] sm:$0xff]
  %v45 = vld [vmem:[%s0 + $0x80] sm:$0xff]
  %v46 = vld [vmem:[%s0 + $0x88] sm:$0xff]
  %v47 = vld [vmem:[%s0 + $0x90] sm:$0xff]
  %v48 = vld [vmem:[%s0 + $0x98] sm:$0xff]
  %v49 = vld [vmem:[%s0 + $0xa0] sm:$0xff]
  %v50 = vld [vmem:[%s0 + $0xa8] sm:$0xff]
  %v51 = vld [vmem:[%s0 + $0xb0] sm:$0xff]
  %v52 = vld [vmem:[%s0 + $0xb8] sm:$0xff]
  %v53 = vld [vmem:[%s0 + $0xc0] sm:$0xff]
  %v54 = vld [vmem:[%s0 + $0xc8] sm:$0xff]
  %v55 = vld [vmem:[%s0 + $0xd0] sm:$0xff]
  %v56 = vld [vmem:[%s0 + $0xd8] sm:$0xff]
  %v57 = vld [vmem:[%s0 + $0xe0] sm:$0xff]
  %v58 = vld [vmem:[%s0 + $0xe8] sm:$0xff]
  %v59 = vld [vmem:[%s0 + $0xf0] sm:$0xff]
  %v60 = vld [vmem:[%s0 + $0xf8] sm:$0xff]
  %v61 = vld [vmem:[%s0 + $0x100] sm:$0xff]
  %v62 = vld [vmem:[%s0 + $0x108] sm:$0xff]
  %v63 = vld [vmem:[%s0 + $0x110] sm:$0xff]
  %v64 = vld [vmem:[%s0 + $0x118] sm:$0xff]
  %v65 = vld [vmem:[%s0 + $0x120] sm:$0xff]
  %v66 = vld [vmem:[%s0 + $0x128] sm:$0xff]
  %v67 = vld [vmem:[%s0 + $0x130] sm:$0xff]
  %v68 = vld [vmem:[%s0 + $0x138] sm:$0xff]
  %v69 = vld [vmem:[%s0 + $0x140] sm:$0xff]
  %v70 = vld [vmem:[%s0 + $0x148] sm:$0xff]
  %v71 = vld [vmem:[%s0 + $0x150] sm:$0xff]
  %v72 = vld [vmem:[%s0 + $0x158] sm:$0xff]
  %v73 = vld [vmem:[%s0 + $0x160] sm:$0xff]
  %v74 = vld [vmem:[%s0 + $0x168] sm:$0xff]
  %v75 = vld [vmem:[%s0 + $0x170] sm:$0xff]
  %v76 = vld [vmem:[%s0 + $0x178] sm:$0xff]
  %v77 = vld [vmem:[%s0 + $0x180] sm:$0xff]
  %v78 = vld [vmem:[%s0 + $0x188] sm:$0xff]
  %v79 = vld [vmem:[%s0 + $0x190] sm:$0xff]
  %v80 = vld [vmem:[%s0 + $0x198] sm:$0xff]
  %v81 = vld [vmem:[%s0 + $0x1a0] sm:$0xff]
  %v82 = vld [vmem:[%s0 + $0x1a8] sm:$0xff]
  %v83 = vld [vmem:[%s0 + $0x1b0] sm:$0xff]
  %v84 = vld [vmem:[%s0 + $0x1b8] sm:$0xff]
  %v85 = vld [vmem:[%s0 + $0x1c0] sm:$0xff]
  %v86 = vld [vmem:[%s0 + $0x1c8] sm:$0xff]
  %v87 = vld [vmem:[%s0 + $0x1d0] sm:$0xff]
  %v88 = vld [vmem:[%s0 + $0x1d8] sm:$0xff]
  %v89 = vld [vmem:[%s0 + $0x1e0] sm:$0xff]
  %v90 = vld [vmem:[%s0 + $0x1e8] sm:$0xff]
  %v91 = vld [vmem:[%s0 + $0x1f0] sm:$0xff]
  %v92 = vld [vmem:[%s0 + $0x1f8] sm:$0xff]
  %v93 = vld [vmem:[%s0 + $0x200] sm:$0xff]
  %v94 = vld [vmem:[%s0 + $0x208] sm:$0xff]
  %v95 = vld [vmem:[%s0 + $0x210] sm:$0xff]
  %v96 = vld [vmem:[%s0 + $0x218] sm:$0xff]
  %v97 = vld [vmem:[%s0 + $0x220] sm:$0xff]
  %v98 = vld [vmem:[%s0 + $0x228] sm:$0xff]
  %v99 = vld [vmem:[%s0 + $0x230] sm:$0xff]
  %v100 = vld [vmem:[%s0 + $0x238] sm:$0xff]
  %v101 = vld [vmem:[%s0 + $0x240] sm:$0xff]
  %v102 = vld [vmem:[%s0 + $0x248] sm:$0xff]
  %v103 = vld [vmem:[%s0 + $0x250] sm:$0xff]
  %v104 = vld [vmem:[%s0 + $0x258] sm:$0xff]
  %v105 = vld [vmem:[%s0 + $0x260] sm:$0xff]
  %v106 = vld [vmem:[%s0 + $0x268] sm:$0xff]
  %v107 = vld [vmem:[%s0 + $0x270] sm:$0xff]
  %v108 = vld [vmem:[%s0 + $0x278] sm:$0xff]
  %v109 = vld [vmem:[%s0 + $0x280] sm:$0xff]
  %v110 = vld [vmem:[%s0 + $0x288] sm:$0xff]
  %v111 = vld [vmem:[%s0 + $0x290] sm:$0xff]
  %v112 = vld [vmem:[%s0 + $0x298] sm:$0xff]
  %v113 = vld [vmem:[%s0 + $0x2a0] sm:$0xff]
  %v114 = vld [vmem:[%s0 + $0x2a8] sm:$0xff]
  %v115 = vld [vmem:[%s0 + $0x2b0] sm:$0xff]
  %v116 = vld [vmem:[%s0 + $0x2b8] sm:$0xff]
  %v117 = vld [vmem:[%s0 + $0x2c0] sm:$0xff]
  %v118 = vld [vmem:[%s0 + $0x2c8] sm:$0xff]
  %v119 = vld [vmem:[%s0 + $0x2d0] sm:$0xff]
  %v120 = vld [vmem:[%s0 + $0x2d8] sm:$0xff]
  %v121 = vld [vmem:[%s0 + $0x2e0] sm:$0xff]
  %v122 = vld [vmem:[%s0 + $0x2e8] sm:$0xff]
  %v123 = vld [vmem:[%s0 + $0x2f0] sm:$0xff]
  %v124 = vld [vmem:[%s0 + $0x2f8] sm:$0xff]
  %v125 = vld [vmem:[%s0 + $0x300] sm:$0xff]
  %v126 = vld [vmem:[%s0 + $0x308] sm:$0xff]
  %v127 = vld [vmem:[%s0 + $0x310] sm:$0xff]
  %v128 = vld [vmem:[%s0 + $0x318] sm:$0xff]
  %v129 = vld [vmem:[%s0 + $0x320] sm:$0xff]
  %v130 = vld [vmem:[%s0 + $0x328] sm:$0xff]
  %v131 = vld [vmem:[%s0 + $0x330] sm:$0xff]
  %v132 = vld [vmem:[%s0 + $0x338] sm:$0xff]
  %v133 = vld [vmem:[%s0 + $0x340] sm:$0xff]
  %v134 = vld [vmem:[%s0 + $0x348] sm:$0xff]
  %v135 = vld [vmem:[%s0 + $0x350] sm:$0xff]
  %v136 = vld [vmem:[%s0 + $0x358] sm:$0xff]
  %v137 = vld [vmem:[%s0 + $0x360] sm:$0xff]
  %v138 = vld [vmem:[%s0 + $0x368] sm:$0xff]
  %v139 = vld [vmem:[%s0 + $0x370] sm:$0xff]
  %v140 = vld [vmem:[%s0 + $0x378] sm:$0xff]
  %v141 = vld [vmem:[%s0 + $0x380] sm:$0xff]
  %v142 = vld [vmem:[%s0 + $0x388] sm:$0xff]
  %v143 = vld [vmem:[%s0 + $0x390] sm:$0xff]
  %v144 = vld [vmem:[%s0 + $0x398] sm:$0xff]
  %v145 = vld [vmem:[%s0 + $0x3a0] sm:$0xff]
  %v146 = vld [vmem:[%s0 + $0x3a8] sm:$0xff]
  %v147 = vld [vmem:[%s0 + $0x3b0] sm:$0xff]
  %v148 = vld [vmem:[%s0 + $0x3b8] sm:$0xff]
  %v149 = vld [vmem:[%s0 + $0x3c0] sm:$0xff]
  %v150 = vld [vmem:[%s0 + $0x3c8] sm:$0xff]
  %v151 = vld [vmem:[%s0 + $0x3d0] sm:$0xff]
  %v152 = vld [vmem:[%s0 + $0x3d8] sm:$0xff]
  %v153 = vld [vmem:[%s0 + $0x3e0] sm:$0xff]
  %v154 = vld [vmem:[%s0 + $0x3e8] sm:$0xff]
  %v155 = vld [vmem:[%s0 + $0x3f0] sm:$0xff]
  %v156 = vld [vmem:[%s0 + $0x3f8] sm:$0xff]
  %v157 = vld [vmem:[%s0 + $0x400] sm:$0xff]
  %v158 = vld [vmem:[%s0 + $0x408] sm:$0xff]
  %v159 = vld [vmem:[%s0 + $0x410] sm:$0xff]
  %v160 = vld [vmem:[%s0 + $0x418] sm:$0xff]
  %v161 = vld [vmem:[%s0 + $0x420] sm:$0xff]
  %v162 = vld [vmem:[%s0 + $0x428] sm:$0xff]
  %v163 = vld [vmem:[%s0 + $0x430] sm:$0xff]
  %v164 = vld [vmem:[%s0 + $0x438] sm:$0xff]
  %v165 = vld [vmem:[%s0 + $0x440] sm:$0xff]
  %v166 = vld [vmem:[%s0 + $0x448] sm:$0xff]
  %v167 = vld [vmem:[%s0 + $0x450] sm:$0xff]
  %v168 = vld [vmem:[%s0 + $0x458] sm:$0xff]
  %v169 = vld [vmem:[%s0 + $0x460] sm:$0xff]
  %v170 = vld [vmem:[%s0 + $0x468] sm:$0xff]
  %v171 = vld [vmem:[%s0 + $0x470] sm:$0xff]
  %v172 = vld [vmem:[%s0 + $0x478] sm:$0xff]
  %v173 = vld [vmem:[%s1] sm:$0xff]
  %v174 = vld [vmem:[%s1 + $0x8] sm:$0xff]
  %v175 = vld [vmem:[%s1 + $0x10] sm:$0xff]
  %v176 = vld [vmem:[%s1 + $0x18] sm:$0xff]
  %v177 = vld [vmem:[%s1 + $0x20] sm:$0xff]
  %v178 = vld [vmem:[%s1 + $0x28] sm:$0xff]
  %v179 = vld [vmem:[%s1 + $0x30] sm:$0xff]
  %v180 = vld [vmem:[%s1 + $0x38] sm:$0xff]
  %v181 = vld [vmem:[%s1 + $0x40] sm:$0xff]
  %v182 = vld [vmem:[%s1 + $0x48] sm:$0xff]
  %v183 = vld [vmem:[%s1 + $0x50] sm:$0xff]
  %v184 = vld [vmem:[%s1 + $0x58] sm:$0xff]
  %v185 = vld [vmem:[%s1 + $0x60] sm:$0xff]
  %v186 = vld [vmem:[%s1 + $0x68] sm:$0xff]
  %v187 = vld [vmem:[%s1 + $0x70] sm:$0xff]
  %v188 = vld [vmem:[%s1 + $0x78] sm:$0xff]
  %v189 = vld [vmem:[%s1 + $0x80] sm:$0xff]
  %v190 = vld [vmem:[%s1 + $0x88] sm:$0xff]
  %v191 = vld [vmem:[%s1 + $0x90] sm:$0xff]
  %v192 = vld [vmem:[%s1 + $0x98] sm:$0xff]
  %v193 = vld [vmem:[%s1 + $0xa0] sm:$0xff]
  %v194 = vld [vmem:[%s1 + $0xa8] sm:$0xff]
  %v195 = vld [vmem:[%s1 + $0xb0] sm:$0xff]
  %v196 = vld [vmem:[%s1 + $0xb8] sm:$0xff]
  %v197 = vld [vmem:[%s1 + $0xc0] sm:$0xff]
  %v198 = vld [vmem:[%s1 + $0xc8] sm:$0xff]
  %v199 = vld [vmem:[%s1 + $0xd0] sm:$0xff]
  %v200 = vld [vmem:[%s1 + $0xd8] sm:$0xff]
  %v201 = vld [vmem:[%s1 + $0xe0] sm:$0xff]
  %v202 = vld [vmem:[%s1 + $0xe8] sm:$0xff]
  %v203 = vld [vmem:[%s1 + $0xf0] sm:$0xff]
  %v204 = vld [vmem:[%s1 + $0xf8] sm:$0xff]
  %v205 = vld [vmem:[%s1 + $0x100] sm:$0xff]
  %v206 = vld [vmem:[%s1 + $0x108] sm:$0xff]
  %v207 = vld [vmem:[%s1 + $0x110] sm:$0xff]
  %v208 = vld [vmem:[%s1 + $0x118] sm:$0xff]
  %v209 = vld [vmem:[%s1 + $0x120] sm:$0xff]
  %v210 = vld [vmem:[%s1 + $0x128] sm:$0xff]
  %v211 = vld [vmem:[%s1 + $0x130] sm:$0xff]
  %v212 = vld [vmem:[%s1 + $0x138] sm:$0xff]
  %v213 = vld [vmem:[%s1 + $0x140] sm:$0xff]
  %v214 = vld [vmem:[%s1 + $0x148] sm:$0xff]
  %v215 = vld [vmem:[%s1 + $0x150] sm:$0xff]
  %v216 = vld [vmem:[%s1 + $0x158] sm:$0xff]
  %v217 = vld [vmem:[%s1 + $0x160] sm:$0xff]
  %v218 = vld [vmem:[%s1 + $0x168] sm:$0xff]
  %v219 = vld [vmem:[%s1 + $0x170] sm:$0xff]
  %v220 = vld [vmem:[%s1 + $0x178] sm:$0xff]
  %v221 = vld [vmem:[%s1 + $0x180] sm:$0xff]
  %v222 = vld [vmem:[%s1 + $0x188] sm:$0xff]
  %v223 = vld [vmem:[%s1 + $0x190] sm:$0xff]
  %v224 = vld [vmem:[%s1 + $0x198] sm:$0xff]
  %v225 = vld [vmem:[%s1 + $0x1a0] sm:$0xff]
  %v226 = vld [vmem:[%s1 + $0x1a8] sm:$0xff]
  %v227 = vld [vmem:[%s1 + $0x1b0] sm:$0xff]
  %v228 = vld [vmem:[%s1 + $0x1b8] sm:$0xff]
  %v229 = vld [vmem:[%s1 + $0x1c0] sm:$0xff]
  %v230 = vld [vmem:[%s1 + $0x1c8] sm:$0xff]
  %v231 = vld [vmem:[%s1 + $0x1d0] sm:$0xff]
  %v232 = vld [vmem:[%s1 + $0x1d8] sm:$0xff]
  %v233 = vld [vmem:[%s1 + $0x1e0] sm:$0xff]
  %v234 = vld [vmem:[%s1 + $0x1e8] sm:$0xff]
  %v235 = vld [vmem:[%s1 + $0x1f0] sm:$0xff]
  %v236 = vld [vmem:[%s1 + $0x1f8] sm:$0xff]
  %v237 = vld [vmem:[%s1 + $0x200] sm:$0xff]
  %v238 = vld [vmem:[%s1 + $0x208] sm:$0xff]
  %v239 = vld [vmem:[%s1 + $0x210] sm:$0xff]
  %v240 = vld [vmem:[%s1 + $0x218] sm:$0xff]
  %v241 = vld [vmem:[%s1 + $0x220] sm:$0xff]
  %v242 = vld [vmem:[%s1 + $0x228] sm:$0xff]
  %v243 = vld [vmem:[%s1 + $0x230] sm:$0xff]
  %v244 = vld [vmem:[%s1 + $0x238] sm:$0xff]
  %v245 = vld [vmem:[%s1 + $0x240] sm:$0xff]
  %v246 = vld [vmem:[%s1 + $0x248] sm:$0xff]
  %v247 = vld [vmem:[%s1 + $0x250] sm:$0xff]
  %v248 = vld [vmem:[%s1 + $0x258] sm:$0xff]
  %v249 = vld [vmem:[%s1 + $0x260] sm:$0xff]
  %v250 = vld [vmem:[%s1 + $0x268] sm:$0xff]
  %v251 = vld [vmem:[%s1 + $0x270] sm:$0xff]
  %v252 = vld [vmem:[%s1 + $0x278] sm:$0xff]
  %v253 = vld [vmem:[%s1 + $0x280] sm:$0xff]
  %v254 = vld [vmem:[%s1 + $0x288] sm:$0xff]
  %v255 = vld [vmem:[%s1 + $0x290] sm:$0xff]
  %v256 = vld [vmem:[%s1 + $0x298] sm:$0xff]
  %v257 = vld [vmem:[%s1 + $0x2a0] sm:$0xff]
  %v258 = vld [vmem:[%s1 + $0x2a8] sm:$0xff]
  %v259 = vld [vmem:[%s1 + $0x2b0] sm:$0xff]
  %v260 = vld [vmem:[%s1 + $0x2b8] sm:$0xff]
  %v261 = vld [vmem:[%s1 + $0x2c0] sm:$0xff]
  %v262 = vld [vmem:[%s1 + $0x2c8] sm:$0xff]
  %v263 = vld [vmem:[%s1 + $0x2d0] sm:$0xff]
  %v264 = vld [vmem:[%s1 + $0x2d8] sm:$0xff]
  %v265 = vld [vmem:[%s1 + $0x2e0] sm:$0xff]
  %v266 = vld [vmem:[%s1 + $0x2e8] sm:$0xff]
  %v267 = vld [vmem:[%s1 + $0x2f0] sm:$0xff]
  %v268 = vld [vmem:[%s1 + $0x2f8] sm:$0xff]
  %v269 = vld [vmem:[%s1 + $0x300] sm:$0xff]
  %v270 = vld [vmem:[%s1 + $0x308] sm:$0xff]
  %v271 = vld [vmem:[%s1 + $0x310] sm:$0xff]
  %v272 = vld [vmem:[%s1 + $0x318] sm:$0xff]
  %v273 = vld [vmem:[%s1 + $0x320] sm:$0xff]
  %v274 = vld [vmem:[%s1 + $0x328] sm:$0xff]
  %v275 = vld [vmem:[%s1 + $0x330] sm:$0xff]
  %v276 = vld [vmem:[%s1 + $0x338] sm:$0xff]
  %v277 = vld [vmem:[%s1 + $0x340] sm:$0xff]
  %v278 = vld [vmem:[%s1 + $0x348] sm:$0xff]
  %v279 = vld [vmem:[%s1 + $0x350] sm:$0xff]
  %v280 = vld [vmem:[%s1 + $0x358] sm:$0xff]
  %v281 = vld [vmem:[%s1 + $0x360] sm:$0xff]
  %v282 = vld [vmem:[%s1 + $0x368] sm:$0xff]
  %v283 = vld [vmem:[%s1 + $0x370] sm:$0xff]
  %v284 = vld [vmem:[%s1 + $0x378] sm:$0xff]
  %v285 = vld [vmem:[%s1 + $0x380] sm:$0xff]
  %v286 = vld [vmem:[%s1 + $0x388] sm:$0xff]
  %v287 = vld [vmem:[%s1 + $0x390] sm:$0xff]
  %v288 = vld [vmem:[%s1 + $0x398] sm:$0xff]
  %v289 = vld [vmem:[%s1 + $0x3a0] sm:$0xff]
  %v290 = vld [vmem:[%s1 + $0x3a8] sm:$0xff]
  %v291 = vld [vmem:[%s1 + $0x3b0] sm:$0xff]
  %v292 = vld [vmem:[%s1 + $0x3b8] sm:$0xff]
  %v293 = vld [vmem:[%s1 + $0x3c0] sm:$0xff]
  %v294 = vld [vmem:[%s1 + $0x3c8] sm:$0xff]
  %v295 = vld [vmem:[%s1 + $0x3d0] sm:$0xff]
  %v296 = vld [vmem:[%s1 + $0x3d8] sm:$0xff]
  %v297 = vld [vmem:[%s1 + $0x3e0] sm:$0xff]
  %v298 = vld [vmem:[%s1 + $0x3e8] sm:$0xff]
  %v299 = vld [vmem:[%s1 + $0x3f0] sm:$0xff]
  %v300 = vld [vmem:[%s1 + $0x3f8] sm:$0xff]
  %v301 = vld [vmem:[%s1 + $0x400] sm:$0xff]
  %v302 = vld [vmem:[%s1 + $0x408] sm:$0xff]
  %v303 = vld [vmem:[%s1 + $0x410] sm:$0xff]
  %v304 = vld [vmem:[%s1 + $0x418] sm:$0xff]
  %v305 = vld [vmem:[%s1 + $0x420] sm:$0xff]
  %v306 = vld [vmem:[%s1 + $0x428] sm:$0xff]
  %v307 = vld [vmem:[%s1 + $0x430] sm:$0xff]
  %v308 = vld [vmem:[%s1 + $0x438] sm:$0xff]
  %v309 = vld [vmem:[%s1 + $0x440] sm:$0xff]
  %v310 = vld [vmem:[%s1 + $0x448] sm:$0xff]
  %v311 = vld [vmem:[%s1 + $0x450] sm:$0xff]
  %v312 = vld [vmem:[%s1 + $0x458] sm:$0xff]
  %v313 = vld [vmem:[%s1 + $0x460] sm:$0xff]
  %v314 = vld [vmem:[%s1 + $0x468] sm:$0xff]
  %v315 = vld [vmem:[%s1 + $0x470] sm:$0xff]
  %v316 = vld [vmem:[%s1 + $0x478] sm:$0xff]
  %317 = vmatprep.subr.mxu0 0.0
  %318 = vmatpush1.msra.mxu0 %v188
  %319 = vmatprep.subr.mxu0 0.0
  %320 = vmatpush1.msra.mxu0 %v187
  %321 = vmatprep.subr.mxu0 0.0
  %322 = vmatpush1.msra.mxu0 %v186
  %323 = vmatprep.subr.mxu0 0.0
  %324 = vmatpush1.msra.mxu0 %v185
  %325 = vmatprep.subr.mxu0 0.0
  %326 = vmatpush1.msra.mxu0 %v184
  %327 = vmatprep.subr.mxu0 0.0
  %328 = vmatpush1.msra.mxu0 %v183
  %329 = vmatprep.subr.mxu0 0.0
  %330 = vmatpush1.msra.mxu0 %v182
  %331 = vmatprep.subr.mxu0 0.0
  %332 = vmatpush1.msra.mxu0 %v181
  %333 = vmatprep.subr.mxu0 0.0
  %334 = vmatpush1.msra.mxu0 %v180
  %335 = vmatprep.subr.mxu0 0.0
  %336 = vmatpush1.msra.mxu0 %v179
  %337 = vmatprep.subr.mxu0 0.0
  %338 = vmatpush1.msra.mxu0 %v178
  %339 = vmatprep.subr.mxu0 0.0
  %340 = vmatpush1.msra.mxu0 %v177
  %341 = vmatprep.subr.mxu0 0.0
  %342 = vmatpush1.msra.mxu0 %v176
  %343 = vmatprep.subr.mxu0 0.0
  %344 = vmatpush1.msra.mxu0 %v175
  %345 = vmatprep.subr.mxu0 0.0
  %346 = vmatpush1.msra.mxu0 %v174
  %347 = vmatprep.subr.mxu0 0.0
  %348 = vmatpush1.msra.mxu0 %v173
  %349 = vmatprep.subr.mxu0 0.0
  %350 = vmatpush2.msra.mxu0 %v204
  %351 = vmatprep.subr.mxu0 0.0
  %352 = vmatpush2.msra.mxu0 %v203
  %353 = vmatprep.subr.mxu0 0.0
  %354 = vmatpush2.msra.mxu0 %v202
  %355 = vmatprep.subr.mxu0 0.0
  %356 = vmatpush2.msra.mxu0 %v201
  %357 = vmatprep.subr.mxu0 0.0
  %358 = vmatpush2.msra.mxu0 %v200
  %359 = vmatprep.subr.mxu0 0.0
  %360 = vmatpush2.msra.mxu0 %v199
  %361 = vmatprep.subr.mxu0 0.0
  %362 = vmatpush2.msra.mxu0 %v198
  %363 = vmatprep.subr.mxu0 0.0
  %364 = vmatpush2.msra.mxu0 %v197
  %365 = vmatprep.subr.mxu0 0.0
  %366 = vmatpush2.msra.mxu0 %v196
  %367 = vmatprep.subr.mxu0 0.0
  %368 = vmatpush2.msra.mxu0 %v195
  %369 = vmatprep.subr.mxu0 0.0
  %370 = vmatpush2.msra.mxu0 %v194
  %371 = vmatprep.subr.mxu0 0.0
  %372 = vmatpush2.msra.mxu0 %v193
  %373 = vmatprep.subr.mxu0 0.0
  %374 = vmatpush2.msra.mxu0 %v192
  %375 = vmatprep.subr.mxu0 0.0
  %376 = vmatpush2.msra.mxu0 %v191
  %377 = vmatprep.subr.mxu0 0.0
  %378 = vmatpush2.msra.mxu0 %v190
  %379 = vmatprep.subr.mxu0 0.0
  %380 = vmatpush2.msra.mxu0 %v189
  %381 = vmatprep.mubr.f32.mxu0 %v30
  %382 = vmatmul.mubr.f32.gmra.mxu0 %v29
  %v383 = vpop.f32.mrf.mxu0
  %v384 = vadd.f32 0.0, %v383
  %v385 = vpop.f32.mrf.mxu0
  %386 = vmatprep.mubr.f32.mxu0 %v39
  %387 = vmatmul.mubr.f32.gmra.mxu0 %v38
  %v388 = vpop.f32.mrf.mxu0
  %v389 = vadd.f32 0.0, %v388
  %v390 = vpop.f32.mrf.mxu0
  %391 = vmatprep.mubr.f32.mxu0 %v48
  %392 = vmatmul.mubr.f32.gmra.mxu0 %v47
  %v393 = vpop.f32.mrf.mxu0
  %v394 = vadd.f32 0.0, %v393
  %v395 = vpop.f32.mrf.mxu0
  %396 = vmatprep.mubr.f32.mxu0 %v57
  %397 = vmatmul.mubr.f32.gmra.mxu0 %v56
  %v398 = vpop.f32.mrf.mxu0
  %v399 = vadd.f32 0.0, %v398
  %v400 = vpop.f32.mrf.mxu0
  %401 = vmatprep.mubr.f32.mxu0 %v66
  %402 = vmatmul.mubr.f32.gmra.mxu0 %v65
  %v403 = vpop.f32.mrf.mxu0
  %v404 = vadd.f32 0.0, %v403
  %v405 = vpop.f32.mrf.mxu0
  %406 = vmatprep.mubr.f32.mxu0 %v75
  %407 = vmatmul.mubr.f32.gmra.mxu0 %v74
  %v408 = vpop.f32.mrf.mxu0
  %v409 = vadd.f32 0.0, %v408
  %v410 = vpop.f32.mrf.mxu0
  %411 = vmatprep.mubr.f32.mxu0 %v84
  %412 = vmatmul.mubr.f32.gmra.mxu0 %v83
  %v413 = vpop.f32.mrf.mxu0
  %v414 = vadd.f32 0.0, %v413
  %v415 = vpop.f32.mrf.mxu0
  %416 = vmatprep.mubr.f32.mxu0 %v93
  %417 = vmatmul.mubr.f32.gmra.mxu0 %v92
  %v418 = vpop.f32.mrf.mxu0
  %v419 = vadd.f32 0.0, %v418
  %v420 = vpop.f32.mrf.mxu0
  %421 = vmatprep.mubr.f32.mxu0 %v102
  %422 = vmatmul.mubr.f32.gmra.mxu0 %v101
  %v423 = vpop.f32.mrf.mxu0
  %v424 = vadd.f32 0.0, %v423
  %v425 = vpop.f32.mrf.mxu0
  %426 = vmatprep.mubr.f32.mxu0 %v111
  %427 = vmatmul.mubr.f32.gmra.mxu0 %v110
  %v428 = vpop.f32.mrf.mxu0
  %v429 = vadd.f32 0.0, %v428
  %v430 = vpop.f32.mrf.mxu0
  %431 = vmatprep.mubr.f32.mxu0 %v120
  %432 = vmatmul.mubr.f32.gmra.mxu0 %v119
  %v433 = vpop.f32.mrf.mxu0
  %v434 = vadd.f32 0.0, %v433
  %v435 = vpop.f32.mrf.mxu0
  %436 = vmatprep.mubr.f32.mxu0 %v129
  %437 = vmatmul.mubr.f32.gmra.mxu0 %v128
  %v438 = vpop.f32.mrf.mxu0
  %v439 = vadd.f32 0.0, %v438
  %v440 = vpop.f32.mrf.mxu0
  %441 = vmatprep.mubr.f32.mxu0 %v138
  %442 = vmatmul.mubr.f32.gmra.mxu0 %v137
  %v443 = vpop.f32.mrf.mxu0
  %v444 = vadd.f32 0.0, %v443
  %v445 = vpop.f32.mrf.mxu0
  %446 = vmatprep.mubr.f32.mxu0 %v147
  %447 = vmatmul.mubr.f32.gmra.mxu0 %v146
  %v448 = vpop.f32.mrf.mxu0
  %v449 = vadd.f32 0.0, %v448
  %v450 = vpop.f32.mrf.mxu0
  %451 = vmatprep.mubr.f32.mxu0 %v156
  %452 = vmatmul.mubr.f32.gmra.mxu0 %v155
  %v453 = vpop.f32.mrf.mxu0
  %v454 = vadd.f32 0.0, %v453
  %v455 = vpop.f32.mrf.mxu0
  %456 = vmatprep.mubr.f32.mxu0 %v165
  %457 = vmatmul.mubr.f32.gmra.mxu0 %v164
  %v458 = vpop.f32.mrf.mxu0
  %v459 = vadd.f32 0.0, %v458
  %v460 = vpop.f32.mrf.mxu0
  %461 = vdwg.mxu0
  %462 = vmatprep.subr.mxu0 0.0
  %463 = vmatpush1.msra.mxu0 %v220
  %464 = vmatprep.subr.mxu0 0.0
  %465 = vmatpush1.msra.mxu0 %v219
  %466 = vmatprep.subr.mxu0 0.0
  %467 = vmatpush1.msra.mxu0 %v218
  %468 = vmatprep.subr.mxu0 0.0
  %469 = vmatpush1.msra.mxu0 %v217
  %470 = vmatprep.subr.mxu0 0.0
  %471 = vmatpush1.msra.mxu0 %v216
  %472 = vmatprep.subr.mxu0 0.0
  %473 = vmatpush1.msra.mxu0 %v215
  %474 = vmatprep.subr.mxu0 0.0
  %475 = vmatpush1.msra.mxu0 %v214
  %476 = vmatprep.subr.mxu0 0.0
  %477 = vmatpush1.msra.mxu0 %v213
  %478 = vmatprep.subr.mxu0 0.0
  %479 = vmatpush1.msra.mxu0 %v212
  %480 = vmatprep.subr.mxu0 0.0
  %481 = vmatpush1.msra.mxu0 %v211
  %482 = vmatprep.subr.mxu0 0.0
  %483 = vmatpush1.msra.mxu0 %v210
  %484 = vmatprep.subr.mxu0 0.0
  %485 = vmatpush1.msra.mxu0 %v209
  %486 = vmatprep.subr.mxu0 0.0
  %487 = vmatpush1.msra.mxu0 %v208
  %488 = vmatprep.subr.mxu0 0.0
  %489 = vmatpush1.msra.mxu0 %v207
  %490 = vmatprep.subr.mxu0 0.0
  %491 = vmatpush1.msra.mxu0 %v206
  %492 = vmatprep.subr.mxu0 0.0
  %493 = vmatpush1.msra.mxu0 %v205
  %494 = vmatprep.subr.mxu0 0.0
  %495 = vmatpush2.msra.mxu0 %v236
  %496 = vmatprep.subr.mxu0 0.0
  %497 = vmatpush2.msra.mxu0 %v235
  %498 = vmatprep.subr.mxu0 0.0
  %499 = vmatpush2.msra.mxu0 %v234
  %500 = vmatprep.subr.mxu0 0.0
  %501 = vmatpush2.msra.mxu0 %v233
  %502 = vmatprep.subr.mxu0 0.0
  %503 = vmatpush2.msra.mxu0 %v232
  %504 = vmatprep.subr.mxu0 0.0
  %505 = vmatpush2.msra.mxu0 %v231
  %506 = vmatprep.subr.mxu0 0.0
  %507 = vmatpush2.msra.mxu0 %v230
  %508 = vmatprep.subr.mxu0 0.0
  %509 = vmatpush2.msra.mxu0 %v229
  %510 = vmatprep.subr.mxu0 0.0
  %511 = vmatpush2.msra.mxu0 %v228
  %512 = vmatprep.subr.mxu0 0.0
  %513 = vmatpush2.msra.mxu0 %v227
  %514 = vmatprep.subr.mxu0 0.0
  %515 = vmatpush2.msra.mxu0 %v226
  %516 = vmatprep.subr.mxu0 0.0
  %517 = vmatpush2.msra.mxu0 %v225
  %518 = vmatprep.subr.mxu0 0.0
  %519 = vmatpush2.msra.mxu0 %v224
  %520 = vmatprep.subr.mxu0 0.0
  %521 = vmatpush2.msra.mxu0 %v223
  %522 = vmatprep.subr.mxu0 0.0
  %523 = vmatpush2.msra.mxu0 %v222
  %524 = vmatprep.subr.mxu0 0.0
  %525 = vmatpush2.msra.mxu0 %v221
  %526 = vmatprep.mubr.f32.mxu0 %v32
  %527 = vmatmul.mubr.f32.gmra.mxu0 %v31
  %v528 = vpop.f32.mrf.mxu0
  %v529 = vadd.f32 %v384, %v528
  %v530 = vpop.f32.mrf.mxu0
  %531 = vmatprep.mubr.f32.mxu0 %v41
  %532 = vmatmul.mubr.f32.gmra.mxu0 %v40
  %v533 = vpop.f32.mrf.mxu0
  %v534 = vadd.f32 %v389, %v533
  %v535 = vpop.f32.mrf.mxu0
  %536 = vmatprep.mubr.f32.mxu0 %v50
  %537 = vmatmul.mubr.f32.gmra.mxu0 %v49
  %v538 = vpop.f32.mrf.mxu0
  %v539 = vadd.f32 %v394, %v538
  %v540 = vpop.f32.mrf.mxu0
  %541 = vmatprep.mubr.f32.mxu0 %v59
  %542 = vmatmul.mubr.f32.gmra.mxu0 %v58
  %v543 = vpop.f32.mrf.mxu0
  %v544 = vadd.f32 %v399, %v543
  %v545 = vpop.f32.mrf.mxu0
  %546 = vmatprep.mubr.f32.mxu0 %v68
  %547 = vmatmul.mubr.f32.gmra.mxu0 %v67
  %v548 = vpop.f32.mrf.mxu0
  %v549 = vadd.f32 %v404, %v548
  %v550 = vpop.f32.mrf.mxu0
  %551 = vmatprep.mubr.f32.mxu0 %v77
  %552 = vmatmul.mubr.f32.gmra.mxu0 %v76
  %v553 = vpop.f32.mrf.mxu0
  %v554 = vadd.f32 %v409, %v553
  %v555 = vpop.f32.mrf.mxu0
  %556 = vmatprep.mubr.f32.mxu0 %v86
  %557 = vmatmul.mubr.f32.gmra.mxu0 %v85
  %v558 = vpop.f32.mrf.mxu0
  %v559 = vadd.f32 %v414, %v558
  %v560 = vpop.f32.mrf.mxu0
  %561 = vmatprep.mubr.f32.mxu0 %v95
  %562 = vmatmul.mubr.f32.gmra.mxu0 %v94
  %v563 = vpop.f32.mrf.mxu0
  %v564 = vadd.f32 %v419, %v563
  %v565 = vpop.f32.mrf.mxu0
  %566 = vmatprep.mubr.f32.mxu0 %v104
  %567 = vmatmul.mubr.f32.gmra.mxu0 %v103
  %v568 = vpop.f32.mrf.mxu0
  %v569 = vadd.f32 %v424, %v568
  %v570 = vpop.f32.mrf.mxu0
  %571 = vmatprep.mubr.f32.mxu0 %v113
  %572 = vmatmul.mubr.f32.gmra.mxu0 %v112
  %v573 = vpop.f32.mrf.mxu0
  %v574 = vadd.f32 %v429, %v573
  %v575 = vpop.f32.mrf.mxu0
  %576 = vmatprep.mubr.f32.mxu0 %v122
  %577 = vmatmul.mubr.f32.gmra.mxu0 %v121
  %v578 = vpop.f32.mrf.mxu0
  %v579 = vadd.f32 %v434, %v578
  %v580 = vpop.f32.mrf.mxu0
  %581 = vmatprep.mubr.f32.mxu0 %v131
  %582 = vmatmul.mubr.f32.gmra.mxu0 %v130
  %v583 = vpop.f32.mrf.mxu0
  %v584 = vadd.f32 %v439, %v583
  %v585 = vpop.f32.mrf.mxu0
  %586 = vmatprep.mubr.f32.mxu0 %v140
  %587 = vmatmul.mubr.f32.gmra.mxu0 %v139
  %v588 = vpop.f32.mrf.mxu0
  %v589 = vadd.f32 %v444, %v588
  %v590 = vpop.f32.mrf.mxu0
  %591 = vmatprep.mubr.f32.mxu0 %v149
  %592 = vmatmul.mubr.f32.gmra.mxu0 %v148
  %v593 = vpop.f32.mrf.mxu0
  %v594 = vadd.f32 %v449, %v593
  %v595 = vpop.f32.mrf.mxu0
  %596 = vmatprep.mubr.f32.mxu0 %v158
  %597 = vmatmul.mubr.f32.gmra.mxu0 %v157
  %v598 = vpop.f32.mrf.mxu0
  %v599 = vadd.f32 %v454, %v598
  %v600 = vpop.f32.mrf.mxu0
  %601 = vmatprep.mubr.f32.mxu0 %v167
  %602 = vmatmul.mubr.f32.gmra.mxu0 %v166
  %v603 = vpop.f32.mrf.mxu0
  %v604 = vadd.f32 %v459, %v603
  %v605 = vpop.f32.mrf.mxu0
  %606 = vdwg.mxu0
  %607 = vmatprep.subr.mxu0 0.0
  %608 = vmatpush1.msra.mxu0 %v252
  %609 = vmatprep.subr.mxu0 0.0
  %610 = vmatpush1.msra.mxu0 %v251
  %611 = vmatprep.subr.mxu0 0.0
  %612 = vmatpush1.msra.mxu0 %v250
  %613 = vmatprep.subr.mxu0 0.0
  %614 = vmatpush1.msra.mxu0 %v249
  %615 = vmatprep.subr.mxu0 0.0
  %616 = vmatpush1.msra.mxu0 %v248
  %617 = vmatprep.subr.mxu0 0.0
  %618 = vmatpush1.msra.mxu0 %v247
  %619 = vmatprep.subr.mxu0 0.0
  %620 = vmatpush1.msra.mxu0 %v246
  %621 = vmatprep.subr.mxu0 0.0
  %622 = vmatpush1.msra.mxu0 %v245
  %623 = vmatprep.subr.mxu0 0.0
  %624 = vmatpush1.msra.mxu0 %v244
  %625 = vmatprep.subr.mxu0 0.0
  %626 = vmatpush1.msra.mxu0 %v243
  %627 = vmatprep.subr.mxu0 0.0
  %628 = vmatpush1.msra.mxu0 %v242
  %629 = vmatprep.subr.mxu0 0.0
  %630 = vmatpush1.msra.mxu0 %v241
  %631 = vmatprep.subr.mxu0 0.0
  %632 = vmatpush1.msra.mxu0 %v240
  %633 = vmatprep.subr.mxu0 0.0
  %634 = vmatpush1.msra.mxu0 %v239
  %635 = vmatprep.subr.mxu0 0.0
  %636 = vmatpush1.msra.mxu0 %v238
  %637 = vmatprep.subr.mxu0 0.0
  %638 = vmatpush1.msra.mxu0 %v237
  %639 = vmatprep.subr.mxu0 0.0
  %640 = vmatpush2.msra.mxu0 %v268
  %641 = vmatprep.subr.mxu0 0.0
  %642 = vmatpush2.msra.mxu0 %v267
  %643 = vmatprep.subr.mxu0 0.0
  %644 = vmatpush2.msra.mxu0 %v266
  %645 = vmatprep.subr.mxu0 0.0
  %646 = vmatpush2.msra.mxu0 %v265
  %647 = vmatprep.subr.mxu0 0.0
  %648 = vmatpush2.msra.mxu0 %v264
  %649 = vmatprep.subr.mxu0 0.0
  %650 = vmatpush2.msra.mxu0 %v263
  %651 = vmatprep.subr.mxu0 0.0
  %652 = vmatpush2.msra.mxu0 %v262
  %653 = vmatprep.subr.mxu0 0.0
  %654 = vmatpush2.msra.mxu0 %v261
  %655 = vmatprep.subr.mxu0 0.0
  %656 = vmatpush2.msra.mxu0 %v260
  %657 = vmatprep.subr.mxu0 0.0
  %658 = vmatpush2.msra.mxu0 %v259
  %659 = vmatprep.subr.mxu0 0.0
  %660 = vmatpush2.msra.mxu0 %v258
  %661 = vmatprep.subr.mxu0 0.0
  %662 = vmatpush2.msra.mxu0 %v257
  %663 = vmatprep.subr.mxu0 0.0
  %664 = vmatpush2.msra.mxu0 %v256
  %665 = vmatprep.subr.mxu0 0.0
  %666 = vmatpush2.msra.mxu0 %v255
  %667 = vmatprep.subr.mxu0 0.0
  %668 = vmatpush2.msra.mxu0 %v254
  %669 = vmatprep.subr.mxu0 0.0
  %670 = vmatpush2.msra.mxu0 %v253
  %671 = vmatprep.mubr.f32.mxu0 %v34
  %672 = vmatmul.mubr.f32.gmra.mxu0 %v33
  %v673 = vpop.f32.mrf.mxu0
  %v674 = vadd.f32 %v529, %v673
  %v675 = vpop.f32.mrf.mxu0
  %676 = vmatprep.mubr.f32.mxu0 %v43
  %677 = vmatmul.mubr.f32.gmra.mxu0 %v42
  %v678 = vpop.f32.mrf.mxu0
  %v679 = vadd.f32 %v534, %v678
  %v680 = vpop.f32.mrf.mxu0
  %681 = vmatprep.mubr.f32.mxu0 %v52
  %682 = vmatmul.mubr.f32.gmra.mxu0 %v51
  %v683 = vpop.f32.mrf.mxu0
  %v684 = vadd.f32 %v539, %v683
  %v685 = vpop.f32.mrf.mxu0
  %686 = vmatprep.mubr.f32.mxu0 %v61
  %687 = vmatmul.mubr.f32.gmra.mxu0 %v60
  %v688 = vpop.f32.mrf.mxu0
  %v689 = vadd.f32 %v544, %v688
  %v690 = vpop.f32.mrf.mxu0
  %691 = vmatprep.mubr.f32.mxu0 %v70
  %692 = vmatmul.mubr.f32.gmra.mxu0 %v69
  %v693 = vpop.f32.mrf.mxu0
  %v694 = vadd.f32 %v549, %v693
  %v695 = vpop.f32.mrf.mxu0
  %696 = vmatprep.mubr.f32.mxu0 %v79
  %697 = vmatmul.mubr.f32.gmra.mxu0 %v78
  %v698 = vpop.f32.mrf.mxu0
  %v699 = vadd.f32 %v554, %v698
  %v700 = vpop.f32.mrf.mxu0
  %701 = vmatprep.mubr.f32.mxu0 %v88
  %702 = vmatmul.mubr.f32.gmra.mxu0 %v87
  %v703 = vpop.f32.mrf.mxu0
  %v704 = vadd.f32 %v559, %v703
  %v705 = vpop.f32.mrf.mxu0
  %706 = vmatprep.mubr.f32.mxu0 %v97
  %707 = vmatmul.mubr.f32.gmra.mxu0 %v96
  %v708 = vpop.f32.mrf.mxu0
  %v709 = vadd.f32 %v564, %v708
  %v710 = vpop.f32.mrf.mxu0
  %711 = vmatprep.mubr.f32.mxu0 %v106
  %712 = vmatmul.mubr.f32.gmra.mxu0 %v105
  %v713 = vpop.f32.mrf.mxu0
  %v714 = vadd.f32 %v569, %v713
  %v715 = vpop.f32.mrf.mxu0
  %716 = vmatprep.mubr.f32.mxu0 %v115
  %717 = vmatmul.mubr.f32.gmra.mxu0 %v114
  %v718 = vpop.f32.mrf.mxu0
  %v719 = vadd.f32 %v574, %v718
  %v720 = vpop.f32.mrf.mxu0
  %721 = vmatprep.mubr.f32.mxu0 %v124
  %722 = vmatmul.mubr.f32.gmra.mxu0 %v123
  %v723 = vpop.f32.mrf.mxu0
  %v724 = vadd.f32 %v579, %v723
  %v725 = vpop.f32.mrf.mxu0
  %726 = vmatprep.mubr.f32.mxu0 %v133
  %727 = vmatmul.mubr.f32.gmra.mxu0 %v132
  %v728 = vpop.f32.mrf.mxu0
  %v729 = vadd.f32 %v584, %v728
  %v730 = vpop.f32.mrf.mxu0
  %731 = vmatprep.mubr.f32.mxu0 %v142
  %732 = vmatmul.mubr.f32.gmra.mxu0 %v141
  %v733 = vpop.f32.mrf.mxu0
  %v734 = vadd.f32 %v589, %v733
  %v735 = vpop.f32.mrf.mxu0
  %736 = vmatprep.mubr.f32.mxu0 %v151
  %737 = vmatmul.mubr.f32.gmra.mxu0 %v150
  %v738 = vpop.f32.mrf.mxu0
  %v739 = vadd.f32 %v594, %v738
  %v740 = vpop.f32.mrf.mxu0
  %741 = vmatprep.mubr.f32.mxu0 %v160
  %742 = vmatmul.mubr.f32.gmra.mxu0 %v159
  %v743 = vpop.f32.mrf.mxu0
  %v744 = vadd.f32 %v599, %v743
  %v745 = vpop.f32.mrf.mxu0
  %746 = vmatprep.mubr.f32.mxu0 %v169
  %747 = vmatmul.mubr.f32.gmra.mxu0 %v168
  %v748 = vpop.f32.mrf.mxu0
  %v749 = vadd.f32 %v604, %v748
  %v750 = vpop.f32.mrf.mxu0
  %751 = vdwg.mxu0
  %752 = vmatprep.subr.mxu0 0.0
  %753 = vmatpush1.msra.mxu0 %v284
  %754 = vmatprep.subr.mxu0 0.0
  %755 = vmatpush1.msra.mxu0 %v283
  %756 = vmatprep.subr.mxu0 0.0
  %757 = vmatpush1.msra.mxu0 %v282
  %758 = vmatprep.subr.mxu0 0.0
  %759 = vmatpush1.msra.mxu0 %v281
  %760 = vmatprep.subr.mxu0 0.0
  %761 = vmatpush1.msra.mxu0 %v280
  %762 = vmatprep.subr.mxu0 0.0
  %763 = vmatpush1.msra.mxu0 %v279
  %764 = vmatprep.subr.mxu0 0.0
  %765 = vmatpush1.msra.mxu0 %v278
  %766 = vmatprep.subr.mxu0 0.0
  %767 = vmatpush1.msra.mxu0 %v277
  %768 = vmatprep.subr.mxu0 0.0
  %769 = vmatpush1.msra.mxu0 %v276
  %770 = vmatprep.subr.mxu0 0.0
  %771 = vmatpush1.msra.mxu0 %v275
  %772 = vmatprep.subr.mxu0 0.0
  %773 = vmatpush1.msra.mxu0 %v274
  %774 = vmatprep.subr.mxu0 0.0
  %775 = vmatpush1.msra.mxu0 %v273
  %776 = vmatprep.subr.mxu0 0.0
  %777 = vmatpush1.msra.mxu0 %v272
  %778 = vmatprep.subr.mxu0 0.0
  %779 = vmatpush1.msra.mxu0 %v271
  %780 = vmatprep.subr.mxu0 0.0
  %781 = vmatpush1.msra.mxu0 %v270
  %782 = vmatprep.subr.mxu0 0.0
  %783 = vmatpush1.msra.mxu0 %v269
  %784 = vmatprep.subr.mxu0 0.0
  %785 = vmatpush2.msra.mxu0 %v300
  %786 = vmatprep.subr.mxu0 0.0
  %787 = vmatpush2.msra.mxu0 %v299
  %788 = vmatprep.subr.mxu0 0.0
  %789 = vmatpush2.msra.mxu0 %v298
  %790 = vmatprep.subr.mxu0 0.0
  %791 = vmatpush2.msra.mxu0 %v297
  %792 = vmatprep.subr.mxu0 0.0
  %793 = vmatpush2.msra.mxu0 %v296
  %794 = vmatprep.subr.mxu0 0.0
  %795 = vmatpush2.msra.mxu0 %v295
  %796 = vmatprep.subr.mxu0 0.0
  %797 = vmatpush2.msra.mxu0 %v294
  %798 = vmatprep.subr.mxu0 0.0
  %799 = vmatpush2.msra.mxu0 %v293
  %800 = vmatprep.subr.mxu0 0.0
  %801 = vmatpush2.msra.mxu0 %v292
  %802 = vmatprep.subr.mxu0 0.0
  %803 = vmatpush2.msra.mxu0 %v291
  %804 = vmatprep.subr.mxu0 0.0
  %805 = vmatpush2.msra.mxu0 %v290
  %806 = vmatprep.subr.mxu0 0.0
  %807 = vmatpush2.msra.mxu0 %v289
  %808 = vmatprep.subr.mxu0 0.0
  %809 = vmatpush2.msra.mxu0 %v288
  %810 = vmatprep.subr.mxu0 0.0
  %811 = vmatpush2.msra.mxu0 %v287
  %812 = vmatprep.subr.mxu0 0.0
  %813 = vmatpush2.msra.mxu0 %v286
  %814 = vmatprep.subr.mxu0 0.0
  %815 = vmatpush2.msra.mxu0 %v285
  %816 = vmatprep.mubr.f32.mxu0 %v36
  %817 = vmatmul.mubr.f32.gmra.mxu0 %v35
  %v818 = vpop.f32.mrf.mxu0
  %v819 = vadd.f32 %v674, %v818
  %v820 = vpop.f32.mrf.mxu0
  %821 = vmatprep.mubr.f32.mxu0 %v45
  %822 = vmatmul.mubr.f32.gmra.mxu0 %v44
  %v823 = vpop.f32.mrf.mxu0
  %v824 = vadd.f32 %v679, %v823
  %v825 = vpop.f32.mrf.mxu0
  %826 = vmatprep.mubr.f32.mxu0 %v54
  %827 = vmatmul.mubr.f32.gmra.mxu0 %v53
  %v828 = vpop.f32.mrf.mxu0
  %v829 = vadd.f32 %v684, %v828
  %v830 = vpop.f32.mrf.mxu0
  %831 = vmatprep.mubr.f32.mxu0 %v63
  %832 = vmatmul.mubr.f32.gmra.mxu0 %v62
  %v833 = vpop.f32.mrf.mxu0
  %v834 = vadd.f32 %v689, %v833
  %v835 = vpop.f32.mrf.mxu0
  %836 = vmatprep.mubr.f32.mxu0 %v72
  %837 = vmatmul.mubr.f32.gmra.mxu0 %v71
  %v838 = vpop.f32.mrf.mxu0
  %v839 = vadd.f32 %v694, %v838
  %v840 = vpop.f32.mrf.mxu0
  %841 = vmatprep.mubr.f32.mxu0 %v81
  %842 = vmatmul.mubr.f32.gmra.mxu0 %v80
  %v843 = vpop.f32.mrf.mxu0
  %v844 = vadd.f32 %v699, %v843
  %v845 = vpop.f32.mrf.mxu0
  %846 = vmatprep.mubr.f32.mxu0 %v90
  %847 = vmatmul.mubr.f32.gmra.mxu0 %v89
  %v848 = vpop.f32.mrf.mxu0
  %v849 = vadd.f32 %v704, %v848
  %v850 = vpop.f32.mrf.mxu0
  %851 = vmatprep.mubr.f32.mxu0 %v99
  %852 = vmatmul.mubr.f32.gmra.mxu0 %v98
  %v853 = vpop.f32.mrf.mxu0
  %v854 = vadd.f32 %v709, %v853
  %v855 = vpop.f32.mrf.mxu0
  %856 = vmatprep.mubr.f32.mxu0 %v108
  %857 = vmatmul.mubr.f32.gmra.mxu0 %v107
  %v858 = vpop.f32.mrf.mxu0
  %v859 = vadd.f32 %v714, %v858
  %v860 = vpop.f32.mrf.mxu0
  %861 = vmatprep.mubr.f32.mxu0 %v117
  %862 = vmatmul.mubr.f32.gmra.mxu0 %v116
  %v863 = vpop.f32.mrf.mxu0
  %v864 = vadd.f32 %v719, %v863
  %v865 = vpop.f32.mrf.mxu0
  %866 = vmatprep.mubr.f32.mxu0 %v126
  %867 = vmatmul.mubr.f32.gmra.mxu0 %v125
  %v868 = vpop.f32.mrf.mxu0
  %v869 = vadd.f32 %v724, %v868
  %v870 = vpop.f32.mrf.mxu0
  %871 = vmatprep.mubr.f32.mxu0 %v135
  %872 = vmatmul.mubr.f32.gmra.mxu0 %v134
  %v873 = vpop.f32.mrf.mxu0
  %v874 = vadd.f32 %v729, %v873
  %v875 = vpop.f32.mrf.mxu0
  %876 = vmatprep.mubr.f32.mxu0 %v144
  %877 = vmatmul.mubr.f32.gmra.mxu0 %v143
  %v878 = vpop.f32.mrf.mxu0
  %v879 = vadd.f32 %v734, %v878
  %v880 = vpop.f32.mrf.mxu0
  %881 = vmatprep.mubr.f32.mxu0 %v153
  %882 = vmatmul.mubr.f32.gmra.mxu0 %v152
  %v883 = vpop.f32.mrf.mxu0
  %v884 = vadd.f32 %v739, %v883
  %v885 = vpop.f32.mrf.mxu0
  %886 = vmatprep.mubr.f32.mxu0 %v162
  %887 = vmatmul.mubr.f32.gmra.mxu0 %v161
  %v888 = vpop.f32.mrf.mxu0
  %v889 = vadd.f32 %v744, %v888
  %v890 = vpop.f32.mrf.mxu0
  %891 = vmatprep.mubr.f32.mxu0 %v171
  %892 = vmatmul.mubr.f32.gmra.mxu0 %v170
  %v893 = vpop.f32.mrf.mxu0
  %v894 = vadd.f32 %v749, %v893
  %v895 = vpop.f32.mrf.mxu0
  %896 = vdwg.mxu0
  %897 = vmatprep.subr.mxu0 0.0
  %898 = vmatpush1.msra.mxu0 %v316
  %899 = vmatprep.subr.mxu0 0.0
  %900 = vmatpush1.msra.mxu0 %v315
  %901 = vmatprep.subr.mxu0 0.0
  %902 = vmatpush1.msra.mxu0 %v314
  %903 = vmatprep.subr.mxu0 0.0
  %904 = vmatpush1.msra.mxu0 %v313
  %905 = vmatprep.subr.mxu0 0.0
  %906 = vmatpush1.msra.mxu0 %v312
  %907 = vmatprep.subr.mxu0 0.0
  %908 = vmatpush1.msra.mxu0 %v311
  %909 = vmatprep.subr.mxu0 0.0
  %910 = vmatpush1.msra.mxu0 %v310
  %911 = vmatprep.subr.mxu0 0.0
  %912 = vmatpush1.msra.mxu0 %v309
  %913 = vmatprep.subr.mxu0 0.0
  %914 = vmatpush1.msra.mxu0 %v308
  %915 = vmatprep.subr.mxu0 0.0
  %916 = vmatpush1.msra.mxu0 %v307
  %917 = vmatprep.subr.mxu0 0.0
  %918 = vmatpush1.msra.mxu0 %v306
  %919 = vmatprep.subr.mxu0 0.0
  %920 = vmatpush1.msra.mxu0 %v305
  %921 = vmatprep.subr.mxu0 0.0
  %922 = vmatpush1.msra.mxu0 %v304
  %923 = vmatprep.subr.mxu0 0.0
  %924 = vmatpush1.msra.mxu0 %v303
  %925 = vmatprep.subr.mxu0 0.0
  %926 = vmatpush1.msra.mxu0 %v302
  %927 = vmatprep.subr.mxu0 0.0
  %928 = vmatpush1.msra.mxu0 %v301
  %929 = vmatprep.subr.mxu0 0.0
  %930 = vmatpush2.msra.mxu0 0.0
  %931 = vmatprep.subr.mxu0 0.0
  %932 = vmatpush2.msra.mxu0 0.0
  %933 = vmatprep.subr.mxu0 0.0
  %934 = vmatpush2.msra.mxu0 0.0
  %935 = vmatprep.subr.mxu0 0.0
  %936 = vmatpush2.msra.mxu0 0.0
  %937 = vmatprep.subr.mxu0 0.0
  %938 = vmatpush2.msra.mxu0 0.0
  %939 = vmatprep.subr.mxu0 0.0
  %940 = vmatpush2.msra.mxu0 0.0
  %941 = vmatprep.subr.mxu0 0.0
  %942 = vmatpush2.msra.mxu0 0.0
  %943 = vmatprep.subr.mxu0 0.0
  %944 = vmatpush2.msra.mxu0 0.0
  %945 = vmatprep.subr.mxu0 0.0
  %946 = vmatpush2.msra.mxu0 0.0
  %947 = vmatprep.subr.mxu0 0.0
  %948 = vmatpush2.msra.mxu0 0.0
  %949 = vmatprep.subr.mxu0 0.0
  %950 = vmatpush2.msra.mxu0 0.0
  %951 = vmatprep.subr.mxu0 0.0
  %952 = vmatpush2.msra.mxu0 0.0
  %953 = vmatprep.subr.mxu0 0.0
  %954 = vmatpush2.msra.mxu0 0.0
  %955 = vmatprep.subr.mxu0 0.0
  %956 = vmatpush2.msra.mxu0 0.0
  %957 = vmatprep.subr.mxu0 0.0
  %958 = vmatpush2.msra.mxu0 0.0
  %959 = vmatprep.subr.mxu0 0.0
  %960 = vmatpush2.msra.mxu0 0.0
  %961 = vmatprep.mubr.f32.mxu0 0.0
  %962 = vmatmul.mubr.f32.gmra.mxu0 %v37
  %v963 = vpop.f32.mrf.mxu0
  %v964 = vadd.f32 %v819, %v963
  %v965 = vpop.f32.mrf.mxu0
  %966 = vmatprep.mubr.f32.mxu0 0.0
  %967 = vmatmul.mubr.f32.gmra.mxu0 %v46
  %v968 = vpop.f32.mrf.mxu0
  %v969 = vadd.f32 %v824, %v968
  %v970 = vpop.f32.mrf.mxu0
  %971 = vmatprep.mubr.f32.mxu0 0.0
  %972 = vmatmul.mubr.f32.gmra.mxu0 %v55
  %v973 = vpop.f32.mrf.mxu0
  %v974 = vadd.f32 %v829, %v973
  %v975 = vpop.f32.mrf.mxu0
  %976 = vmatprep.mubr.f32.mxu0 0.0
  %977 = vmatmul.mubr.f32.gmra.mxu0 %v64
  %v978 = vpop.f32.mrf.mxu0
  %v979 = vadd.f32 %v834, %v978
  %v980 = vpop.f32.mrf.mxu0
  %981 = vmatprep.mubr.f32.mxu0 0.0
  %982 = vmatmul.mubr.f32.gmra.mxu0 %v73
  %v983 = vpop.f32.mrf.mxu0
  %v984 = vadd.f32 %v839, %v983
  %v985 = vpop.f32.mrf.mxu0
  %986 = vmatprep.mubr.f32.mxu0 0.0
  %987 = vmatmul.mubr.f32.gmra.mxu0 %v82
  %v988 = vpop.f32.mrf.mxu0
  %v989 = vadd.f32 %v844, %v988
  %v990 = vpop.f32.mrf.mxu0
  %991 = vmatprep.mubr.f32.mxu0 0.0
  %992 = vmatmul.mubr.f32.gmra.mxu0 %v91
  %v993 = vpop.f32.mrf.mxu0
  %v994 = vadd.f32 %v849, %v993
  %v995 = vpop.f32.mrf.mxu0
  %996 = vmatprep.mubr.f32.mxu0 0.0
  %997 = vmatmul.mubr.f32.gmra.mxu0 %v100
  %v998 = vpop.f32.mrf.mxu0
  %v999 = vadd.f32 %v854, %v998
  %v1000 = vpop.f32.mrf.mxu0
  %1001 = vmatprep.mubr.f32.mxu0 0.0
  %1002 = vmatmul.mubr.f32.gmra.mxu0 %v109
  %v1003 = vpop.f32.mrf.mxu0
  %v1004 = vadd.f32 %v859, %v1003
  %v1005 = vpop.f32.mrf.mxu0
  %1006 = vmatprep.mubr.f32.mxu0 0.0
  %1007 = vmatmul.mubr.f32.gmra.mxu0 %v118
  %v1008 = vpop.f32.mrf.mxu0
  %v1009 = vadd.f32 %v864, %v1008
  %v1010 = vpop.f32.mrf.mxu0
  %1011 = vmatprep.mubr.f32.mxu0 0.0
  %1012 = vmatmul.mubr.f32.gmra.mxu0 %v127
  %v1013 = vpop.f32.mrf.mxu0
  %v1014 = vadd.f32 %v869, %v1013
  %v1015 = vpop.f32.mrf.mxu0
  %1016 = vmatprep.mubr.f32.mxu0 0.0
  %1017 = vmatmul.mubr.f32.gmra.mxu0 %v136
  %v1018 = vpop.f32.mrf.mxu0
  %v1019 = vadd.f32 %v874, %v1018
  %v1020 = vpop.f32.mrf.mxu0
  %1021 = vmatprep.mubr.f32.mxu0 0.0
  %1022 = vmatmul.mubr.f32.gmra.mxu0 %v145
  %v1023 = vpop.f32.mrf.mxu0
  %v1024 = vadd.f32 %v879, %v1023
  %v1025 = vpop.f32.mrf.mxu0
  %1026 = vmatprep.mubr.f32.mxu0 0.0
  %1027 = vmatmul.mubr.f32.gmra.mxu0 %v154
  %v1028 = vpop.f32.mrf.mxu0
  %v1029 = vadd.f32 %v884, %v1028
  %v1030 = vpop.f32.mrf.mxu0
  %1031 = vmatprep.mubr.f32.mxu0 0.0
  %1032 = vmatmul.mubr.f32.gmra.mxu0 %v163
  %v1033 = vpop.f32.mrf.mxu0
  %v1034 = vadd.f32 %v889, %v1033
  %v1035 = vpop.f32.mrf.mxu0
  %1036 = vmatprep.mubr.f32.mxu0 0.0
  %1037 = vmatmul.mubr.f32.gmra.mxu0 %v172
  %v1038 = vpop.f32.mrf.mxu0
  %v1039 = vadd.f32 %v894, %v1038
  %v1040 = vpop.f32.mrf.mxu0
  %1041 = vdwg.mxu0
  %v1042 = vld [vmem:[%s2] sm:$0x1]
  %v1044 = vlaneseq
  %v1045 = vshrl.u32 %v1044, 7
  %v1046 = vsub.s32 0, %v1045
  %v1047 = vrot.slane %v1042, %v1046
  %v1049 = vmul.f32 %v964, %v1047
  %v1050 = vmul.f32 %v969, %v1047
  %v1051 = vmul.f32 %v974, %v1047
  %v1052 = vmul.f32 %v979, %v1047
  %v1053 = vmul.f32 %v984, %v1047
  %v1054 = vmul.f32 %v989, %v1047
  %v1055 = vmul.f32 %v994, %v1047
  %v1056 = vmul.f32 %v999, %v1047
  %v1057 = vmul.f32 %v1004, %v1047
  %v1058 = vmul.f32 %v1009, %v1047
  %v1059 = vmul.f32 %v1014, %v1047
  %v1060 = vmul.f32 %v1019, %v1047
  %v1061 = vmul.f32 %v1024, %v1047
  %v1062 = vmul.f32 %v1029, %v1047
  %v1063 = vmul.f32 %v1034, %v1047
  %v1064 = vmul.f32 %v1039, %v1047
  %v1065 = vld [vmem:[%s3] sm:$0x1]
  %v1067 = vlaneseq
  %v1068 = vshrl.u32 %v1067, 7
  %v1069 = vsub.s32 0, %v1068
  %v1070 = vrot.slane %v1065, %v1069
  %v1072 = vadd.f32 %v1049, %v1070
  %v1073 = vadd.f32 %v1050, %v1070
  %v1074 = vadd.f32 %v1051, %v1070
  %v1075 = vadd.f32 %v1052, %v1070
  %v1076 = vadd.f32 %v1053, %v1070
  %v1077 = vadd.f32 %v1054, %v1070
  %v1078 = vadd.f32 %v1055, %v1070
  %v1079 = vadd.f32 %v1056, %v1070
  %v1080 = vadd.f32 %v1057, %v1070
  %v1081 = vadd.f32 %v1058, %v1070
  %v1082 = vadd.f32 %v1059, %v1070
  %v1083 = vadd.f32 %v1060, %v1070
  %v1084 = vadd.f32 %v1061, %v1070
  %v1085 = vadd.f32 %v1062, %v1070
  %v1086 = vadd.f32 %v1063, %v1070
  %v1087 = vadd.f32 %v1064, %v1070
  %v1088 = vld [vmem:[%s4] sm:$0xff]
  %v1089 = vld [vmem:[%s4 + $0x8] sm:$0xff]
  %v1090 = vld [vmem:[%s4 + $0x10] sm:$0xff]
  %v1091 = vld [vmem:[%s4 + $0x18] sm:$0xff]
  %v1092 = vld [vmem:[%s4 + $0x20] sm:$0xff]
  %v1093 = vld [vmem:[%s4 + $0x28] sm:$0xff]
  %v1094 = vld [vmem:[%s4 + $0x30] sm:$0xff]
  %v1095 = vld [vmem:[%s4 + $0x38] sm:$0xff]
  %v1096 = vld [vmem:[%s4 + $0x40] sm:$0xff]
  %v1097 = vld [vmem:[%s4 + $0x48] sm:$0xff]
  %v1098 = vld [vmem:[%s4 + $0x50] sm:$0xff]
  %v1099 = vld [vmem:[%s4 + $0x58] sm:$0xff]
  %v1100 = vld [vmem:[%s4 + $0x60] sm:$0xff]
  %v1101 = vld [vmem:[%s4 + $0x68] sm:$0xff]
  %v1102 = vld [vmem:[%s4 + $0x70] sm:$0xff]
  %v1103 = vld [vmem:[%s4 + $0x78] sm:$0xff]
  %v1104 = vld [vmem:[%s5] sm:$0xff]
  %v1105 = vld [vmem:[%s5 + $0x8] sm:$0xff]
  %v1106 = vld [vmem:[%s5 + $0x10] sm:$0xff]
  %v1107 = vld [vmem:[%s5 + $0x18] sm:$0xff]
  %v1108 = vld [vmem:[%s5 + $0x20] sm:$0xff]
  %v1109 = vld [vmem:[%s5 + $0x28] sm:$0xff]
  %v1110 = vld [vmem:[%s5 + $0x30] sm:$0xff]
  %v1111 = vld [vmem:[%s5 + $0x38] sm:$0xff]
  %v1112 = vld [vmem:[%s5 + $0x40] sm:$0xff]
  %v1113 = vld [vmem:[%s5 + $0x48] sm:$0xff]
  %v1114 = vld [vmem:[%s5 + $0x50] sm:$0xff]
  %v1115 = vld [vmem:[%s5 + $0x58] sm:$0xff]
  %v1116 = vld [vmem:[%s5 + $0x60] sm:$0xff]
  %v1117 = vld [vmem:[%s5 + $0x68] sm:$0xff]
  %v1118 = vld [vmem:[%s5 + $0x70] sm:$0xff]
  %v1119 = vld [vmem:[%s5 + $0x78] sm:$0xff]
  %1120 = vmatprep.subr.mxu0 0.0
  %1121 = vmatpush1.msra.mxu0 %v1119
  %1122 = vmatprep.subr.mxu0 0.0
  %1123 = vmatpush1.msra.mxu0 %v1118
  %1124 = vmatprep.subr.mxu0 0.0
  %1125 = vmatpush1.msra.mxu0 %v1117
  %1126 = vmatprep.subr.mxu0 0.0
  %1127 = vmatpush1.msra.mxu0 %v1116
  %1128 = vmatprep.subr.mxu0 0.0
  %1129 = vmatpush1.msra.mxu0 %v1115
  %1130 = vmatprep.subr.mxu0 0.0
  %1131 = vmatpush1.msra.mxu0 %v1114
  %1132 = vmatprep.subr.mxu0 0.0
  %1133 = vmatpush1.msra.mxu0 %v1113
  %1134 = vmatprep.subr.mxu0 0.0
  %1135 = vmatpush1.msra.mxu0 %v1112
  %1136 = vmatprep.subr.mxu0 0.0
  %1137 = vmatpush1.msra.mxu0 %v1111
  %1138 = vmatprep.subr.mxu0 0.0
  %1139 = vmatpush1.msra.mxu0 %v1110
  %1140 = vmatprep.subr.mxu0 0.0
  %1141 = vmatpush1.msra.mxu0 %v1109
  %1142 = vmatprep.subr.mxu0 0.0
  %1143 = vmatpush1.msra.mxu0 %v1108
  %1144 = vmatprep.subr.mxu0 0.0
  %1145 = vmatpush1.msra.mxu0 %v1107
  %1146 = vmatprep.subr.mxu0 0.0
  %1147 = vmatpush1.msra.mxu0 %v1106
  %1148 = vmatprep.subr.mxu0 0.0
  %1149 = vmatpush1.msra.mxu0 %v1105
  %1150 = vmatprep.subr.mxu0 0.0
  %1151 = vmatpush1.msra.mxu0 %v1104
  %1152 = vmatprep.subr.mxu0 0.0
  %1153 = vmatpush2.msra.mxu0 0.0
  %1154 = vmatprep.subr.mxu0 0.0
  %1155 = vmatpush2.msra.mxu0 0.0
  %1156 = vmatprep.subr.mxu0 0.0
  %1157 = vmatpush2.msra.mxu0 0.0
  %1158 = vmatprep.subr.mxu0 0.0
  %1159 = vmatpush2.msra.mxu0 0.0
  %1160 = vmatprep.subr.mxu0 0.0
  %1161 = vmatpush2.msra.mxu0 0.0
  %1162 = vmatprep.subr.mxu0 0.0
  %1163 = vmatpush2.msra.mxu0 0.0
  %1164 = vmatprep.subr.mxu0 0.0
  %1165 = vmatpush2.msra.mxu0 0.0
  %1166 = vmatprep.subr.mxu0 0.0
  %1167 = vmatpush2.msra.mxu0 0.0
  %1168 = vmatprep.subr.mxu0 0.0
  %1169 = vmatpush2.msra.mxu0 0.0
  %1170 = vmatprep.subr.mxu0 0.0
  %1171 = vmatpush2.msra.mxu0 0.0
  %1172 = vmatprep.subr.mxu0 0.0
  %1173 = vmatpush2.msra.mxu0 0.0
  %1174 = vmatprep.subr.mxu0 0.0
  %1175 = vmatpush2.msra.mxu0 0.0
  %1176 = vmatprep.subr.mxu0 0.0
  %1177 = vmatpush2.msra.mxu0 0.0
  %1178 = vmatprep.subr.mxu0 0.0
  %1179 = vmatpush2.msra.mxu0 0.0
  %1180 = vmatprep.subr.mxu0 0.0
  %1181 = vmatpush2.msra.mxu0 0.0
  %1182 = vmatprep.subr.mxu0 0.0
  %1183 = vmatpush2.msra.mxu0 0.0
  %1184 = vmatprep.mubr.f32.mxu0 0.0
  %1185 = vmatmul.mubr.f32.gmra.mxu0 %v1088
  %v1186 = vpop.f32.mrf.mxu0
  %v1187 = vadd.f32 0.0, %v1186
  %v1188 = vpop.f32.mrf.mxu0
  %1189 = vmatprep.mubr.f32.mxu0 0.0
  %1190 = vmatmul.mubr.f32.gmra.mxu0 %v1089
  %v1191 = vpop.f32.mrf.mxu0
  %v1192 = vadd.f32 0.0, %v1191
  %v1193 = vpop.f32.mrf.mxu0
  %1194 = vmatprep.mubr.f32.mxu0 0.0
  %1195 = vmatmul.mubr.f32.gmra.mxu0 %v1090
  %v1196 = vpop.f32.mrf.mxu0
  %v1197 = vadd.f32 0.0, %v1196
  %v1198 = vpop.f32.mrf.mxu0
  %1199 = vmatprep.mubr.f32.mxu0 0.0
  %1200 = vmatmul.mubr.f32.gmra.mxu0 %v1091
  %v1201 = vpop.f32.mrf.mxu0
  %v1202 = vadd.f32 0.0, %v1201
  %v1203 = vpop.f32.mrf.mxu0
  %1204 = vmatprep.mubr.f32.mxu0 0.0
  %1205 = vmatmul.mubr.f32.gmra.mxu0 %v1092
  %v1206 = vpop.f32.mrf.mxu0
  %v1207 = vadd.f32 0.0, %v1206
  %v1208 = vpop.f32.mrf.mxu0
  %1209 = vmatprep.mubr.f32.mxu0 0.0
  %1210 = vmatmul.mubr.f32.gmra.mxu0 %v1093
  %v1211 = vpop.f32.mrf.mxu0
  %v1212 = vadd.f32 0.0, %v1211
  %v1213 = vpop.f32.mrf.mxu0
  %1214 = vmatprep.mubr.f32.mxu0 0.0
  %1215 = vmatmul.mubr.f32.gmra.mxu0 %v1094
  %v1216 = vpop.f32.mrf.mxu0
  %v1217 = vadd.f32 0.0, %v1216
  %v1218 = vpop.f32.mrf.mxu0
  %1219 = vmatprep.mubr.f32.mxu0 0.0
  %1220 = vmatmul.mubr.f32.gmra.mxu0 %v1095
  %v1221 = vpop.f32.mrf.mxu0
  %v1222 = vadd.f32 0.0, %v1221
  %v1223 = vpop.f32.mrf.mxu0
  %1224 = vmatprep.mubr.f32.mxu0 0.0
  %1225 = vmatmul.mubr.f32.gmra.mxu0 %v1096
  %v1226 = vpop.f32.mrf.mxu0
  %v1227 = vadd.f32 0.0, %v1226
  %v1228 = vpop.f32.mrf.mxu0
  %1229 = vmatprep.mubr.f32.mxu0 0.0
  %1230 = vmatmul.mubr.f32.gmra.mxu0 %v1097
  %v1231 = vpop.f32.mrf.mxu0
  %v1232 = vadd.f32 0.0, %v1231
  %v1233 = vpop.f32.mrf.mxu0
  %1234 = vmatprep.mubr.f32.mxu0 0.0
  %1235 = vmatmul.mubr.f32.gmra.mxu0 %v1098
  %v1236 = vpop.f32.mrf.mxu0
  %v1237 = vadd.f32 0.0, %v1236
  %v1238 = vpop.f32.mrf.mxu0
  %1239 = vmatprep.mubr.f32.mxu0 0.0
  %1240 = vmatmul.mubr.f32.gmra.mxu0 %v1099
  %v1241 = vpop.f32.mrf.mxu0
  %v1242 = vadd.f32 0.0, %v1241
  %v1243 = vpop.f32.mrf.mxu0
  %1244 = vmatprep.mubr.f32.mxu0 0.0
  %1245 = vmatmul.mubr.f32.gmra.mxu0 %v1100
  %v1246 = vpop.f32.mrf.mxu0
  %v1247 = vadd.f32 0.0, %v1246
  %v1248 = vpop.f32.mrf.mxu0
  %1249 = vmatprep.mubr.f32.mxu0 0.0
  %1250 = vmatmul.mubr.f32.gmra.mxu0 %v1101
  %v1251 = vpop.f32.mrf.mxu0
  %v1252 = vadd.f32 0.0, %v1251
  %v1253 = vpop.f32.mrf.mxu0
  %1254 = vmatprep.mubr.f32.mxu0 0.0
  %1255 = vmatmul.mubr.f32.gmra.mxu0 %v1102
  %v1256 = vpop.f32.mrf.mxu0
  %v1257 = vadd.f32 0.0, %v1256
  %v1258 = vpop.f32.mrf.mxu0
  %1259 = vmatprep.mubr.f32.mxu0 0.0
  %1260 = vmatmul.mubr.f32.gmra.mxu0 %v1103
  %v1261 = vpop.f32.mrf.mxu0
  %v1262 = vadd.f32 0.0, %v1261
  %v1263 = vpop.f32.mrf.mxu0
  %1264 = vdwg.mxu0
  %v1265 = vld [vmem:[%s6] sm:$0x1]
  %v1267 = vlaneseq
  %v1268 = vshrl.u32 %v1267, 7
  %v1269 = vsub.s32 0, %v1268
  %v1270 = vrot.slane %v1265, %v1269
  %v1272 = vmul.f32 %v1187, %v1270
  %v1273 = vmul.f32 %v1192, %v1270
  %v1274 = vmul.f32 %v1197, %v1270
  %v1275 = vmul.f32 %v1202, %v1270
  %v1276 = vmul.f32 %v1207, %v1270
  %v1277 = vmul.f32 %v1212, %v1270
  %v1278 = vmul.f32 %v1217, %v1270
  %v1279 = vmul.f32 %v1222, %v1270
  %v1280 = vmul.f32 %v1227, %v1270
  %v1281 = vmul.f32 %v1232, %v1270
  %v1282 = vmul.f32 %v1237, %v1270
  %v1283 = vmul.f32 %v1242, %v1270
  %v1284 = vmul.f32 %v1247, %v1270
  %v1285 = vmul.f32 %v1252, %v1270
  %v1286 = vmul.f32 %v1257, %v1270
  %v1287 = vmul.f32 %v1262, %v1270
  %v1288 = vld [vmem:[%s7] sm:$0x1]
  %v1290 = vlaneseq
  %v1291 = vshrl.u32 %v1290, 7
  %v1292 = vsub.s32 0, %v1291
  %v1293 = vrot.slane %v1288, %v1292
  %v1295 = vadd.f32 %v1272, %v1293
  %v1296 = vadd.f32 %v1273, %v1293
  %v1297 = vadd.f32 %v1274, %v1293
  %v1298 = vadd.f32 %v1275, %v1293
  %v1299 = vadd.f32 %v1276, %v1293
  %v1300 = vadd.f32 %v1277, %v1293
  %v1301 = vadd.f32 %v1278, %v1293
  %v1302 = vadd.f32 %v1279, %v1293
  %v1303 = vadd.f32 %v1280, %v1293
  %v1304 = vadd.f32 %v1281, %v1293
  %v1305 = vadd.f32 %v1282, %v1293
  %v1306 = vadd.f32 %v1283, %v1293
  %v1307 = vadd.f32 %v1284, %v1293
  %v1308 = vadd.f32 %v1285, %v1293
  %v1309 = vadd.f32 %v1286, %v1293
  %v1310 = vadd.f32 %v1287, %v1293
  %v1311 = vadd.f32 %v1072, %v1295
  %v1312 = vadd.f32 %v1073, %v1296
  %v1313 = vadd.f32 %v1074, %v1297
  %v1314 = vadd.f32 %v1075, %v1298
  %v1315 = vadd.f32 %v1076, %v1299
  %v1316 = vadd.f32 %v1077, %v1300
  %v1317 = vadd.f32 %v1078, %v1301
  %v1318 = vadd.f32 %v1079, %v1302
  %v1319 = vadd.f32 %v1080, %v1303
  %v1320 = vadd.f32 %v1081, %v1304
  %v1321 = vadd.f32 %v1082, %v1305
  %v1322 = vadd.f32 %v1083, %v1306
  %v1323 = vadd.f32 %v1084, %v1307
  %v1324 = vadd.f32 %v1085, %v1308
  %v1325 = vadd.f32 %v1086, %v1309
  %v1326 = vadd.f32 %v1087, %v1310
  %v1327 = vmax.f32 %v1311, 0.0
  %v1328 = vmax.f32 %v1312, 0.0
  %v1329 = vmax.f32 %v1313, 0.0
  %v1330 = vmax.f32 %v1314, 0.0
  %v1331 = vmax.f32 %v1315, 0.0
  %v1332 = vmax.f32 %v1316, 0.0
  %v1333 = vmax.f32 %v1317, 0.0
  %v1334 = vmax.f32 %v1318, 0.0
  %v1335 = vmax.f32 %v1319, 0.0
  %v1336 = vmax.f32 %v1320, 0.0
  %v1337 = vmax.f32 %v1321, 0.0
  %v1338 = vmax.f32 %v1322, 0.0
  %v1339 = vmax.f32 %v1323, 0.0
  %v1340 = vmax.f32 %v1324, 0.0
  %v1341 = vmax.f32 %v1325, 0.0
  %v1342 = vmax.f32 %v1326, 0.0
  %1343 = vst [vmem:[%s8] sm:$0xff] %v1327
  %1344 = vst [vmem:[%s8 + $0x8] sm:$0xff] %v1328
  %1345 = vst [vmem:[%s8 + $0x10] sm:$0xff] %v1329
  %1346 = vst [vmem:[%s8 + $0x18] sm:$0xff] %v1330
  %1347 = vst [vmem:[%s8 + $0x20] sm:$0xff] %v1331
  %1348 = vst [vmem:[%s8 + $0x28] sm:$0xff] %v1332
  %1349 = vst [vmem:[%s8 + $0x30] sm:$0xff] %v1333
  %1350 = vst [vmem:[%s8 + $0x38] sm:$0xff] %v1334
  %1351 = vst [vmem:[%s8 + $0x40] sm:$0xff] %v1335
  %1352 = vst [vmem:[%s8 + $0x48] sm:$0xff] %v1336
  %1353 = vst [vmem:[%s8 + $0x50] sm:$0xff] %v1337
  %1354 = vst [vmem:[%s8 + $0x58] sm:$0xff] %v1338
  %1355 = vst [vmem:[%s8 + $0x60] sm:$0xff] %v1339
  %1356 = vst [vmem:[%s8 + $0x68] sm:$0xff] %v1340
  %1357 = vst [vmem:[%s8 + $0x70] sm:$0xff] %v1341
  %1358 = vst [vmem:[%s8 + $0x78] sm:$0xff] %v1342
  // Predicated region
  $region34: #{resnet_block_forward.3} parent=0 // pred_check
    _
  $region35: #{resnet_block_forward.3} parent=0 // pred_check_branch
    %1360 = sbr.rel (0) target = $region37
  $region36: #{resnet_block_forward.3} parent=0 // pred_region
    _
  $region37: #{resnet_block_forward.3} parent=0 // pred_fallthru
    _
  // Predicated region
  $region38: #{resnet_block_forward.3} parent=0 // pred_check
    _
  $region39: #{resnet_block_forward.3} parent=0 // pred_check_branch
    %1362 = sbr.rel (0) target = $region41
  $region40: #{resnet_block_forward.3} parent=0 // pred_region
    _
  $region41: #{resnet_block_forward.3} parent=0 // pred_fallthru
    _

</llo_original>
